<compile_context>
chip_gen: v7x
topology: tpu7x:2x2x1
jax: 0.10.0
libtpu: 0.0.40
codegen_flags: <defaults>
</compile_context>

<pallas_src>
from functools import partial

import jax
import jax.numpy as jnp
from jax.experimental import pallas as pl
from jax.experimental.pallas import tpu as pltpu

# ---------------------------------------------------------------- dimensions
D_IN, D_H1, D_H2, D_OUT = 12, 6, 6, 1
LANES = 128
SUB_ROWS = 16          # sublane rows per inner-loop step (16*128 = 2048 samples)

# flat parameter packing offsets (row-major PyTorch (out, in) weight layout)
OFF_W1 = 0
OFF_B1 = OFF_W1 + D_H1 * D_IN            # 72
OFF_W2 = OFF_B1 + D_H1                   # 78
OFF_B2 = OFF_W2 + D_H2 * D_H1            # 114
OFF_W3 = OFF_B2 + D_H2                   # 120
OFF_B3 = OFF_W3 + D_OUT * D_H2           # 126
N_PARAMS = OFF_B3 + D_OUT                # 127
N_PARAMS_PAD = 128


def _round_up(x, m):
    return ((x + m - 1) // m) * m


# ------------------------------------------------------------------- kernel
def ann_kernel(p_ref, x_ref, o_ref):
    """p_ref: f32[128] SMEM (packed weights/biases).
       x_ref: f32[12, sb, 128] VMEM (feature-major, batch on sublanes+lanes).
       o_ref: f32[sb, 128] VMEM (lane-dense output)."""
    # Read all 127 scalars once per grid step (cheap SMEM scalar loads).
    w1 = [[p_ref[OFF_W1 + j * D_IN + k] for k in range(D_IN)] for j in range(D_H1)]
    b1 = [p_ref[OFF_B1 + j] for j in range(D_H1)]
    w2 = [[p_ref[OFF_W2 + j * D_H1 + k] for k in range(D_H1)] for j in range(D_H2)]
    b2 = [p_ref[OFF_B2 + j] for j in range(D_H2)]
    w3 = [p_ref[OFF_W3 + k] for k in range(D_H2)]
    b3 = p_ref[OFF_B3]

    sb = x_ref.shape[1]
    assert sb % SUB_ROWS == 0
    n_sub = sb // SUB_ROWS

    # Rolled loop over 16-row sub-chunks: the full 3-layer pipeline runs per
    # sub-chunk, keeping h1/h2 in registers and bounding live ranges.
    @pl.loop(0, n_sub)
    def _(c):
        r = pl.multiple_of(c * SUB_ROWS, SUB_ROWS)

        # ---- layer1 + ReLU (feature-outer accumulation keeps liveness low)
        x0 = x_ref[0, pl.ds(r, SUB_ROWS), :]
        h1 = [x0 * w1[j][0] for j in range(D_H1)]
        for k in range(1, D_IN):
            xk = x_ref[k, pl.ds(r, SUB_ROWS), :]
            h1 = [h1[j] + xk * w1[j][k] for j in range(D_H1)]
        h1 = [jnp.maximum(h1[j] + b1[j], 0.0) for j in range(D_H1)]

        # ---- layer2 + ReLU
        h2 = [h1[0] * w2[j][0] for j in range(D_H2)]
        for k in range(1, D_H1):
            h2 = [h2[j] + h1[k] * w2[j][k] for j in range(D_H2)]
        h2 = [jnp.maximum(h2[j] + b2[j], 0.0) for j in range(D_H2)]

        # ---- output layer + Sigmoid (tanh form -> EUP slot, identical math)
        z = h2[0] * w3[0]
        for k in range(1, D_H2):
            z = z + h2[k] * w3[k]
        z = z + b3
        o_ref[pl.ds(r, SUB_ROWS), :] = 0.5 * jnp.tanh(0.5 * z) + 0.5


# ------------------------------------------------------------------ wrapper
def pack_params(p):
    flat = jnp.concatenate([
        p["w1"].reshape(-1), p["b1"].reshape(-1),
        p["w2"].reshape(-1), p["b2"].reshape(-1),
        p["w3"].reshape(-1), p["b3"].reshape(-1),
    ]).astype(jnp.float32)
    return jnp.pad(flat, (0, N_PARAMS_PAD - N_PARAMS))


@partial(jax.jit, static_argnums=(2,))
def _ann_forward_jit(x, params, block_rows):
    assert block_rows % SUB_ROWS == 0 and block_rows >= SUB_ROWS

    x = jnp.asarray(x, jnp.float32)
    B = x.shape[0]
    p_flat = pack_params(params)

    # ---- batch tiling (lane-dense, feature-major) -------------------------
    need_rows = pl.cdiv(B, LANES)                 # rows of 128 real samples
    if need_rows >= 2 * SUB_ROWS:
        # enough work to split: >= 2 tiles (even, for megacore), each <= block_rows
        num_tiles = max(2, pl.cdiv(need_rows, block_rows))
        num_tiles += num_tiles % 2
    else:
        num_tiles = 1
    sb = min(block_rows, _round_up(pl.cdiv(need_rows, num_tiles), SUB_ROWS))
    rows = sb * num_tiles
    b_pad = rows * LANES

    x_pad = jnp.pad(x, ((0, b_pad - B), (0, 0)))
    # (B_pad, 12) -> (12, B_pad) -> (12, rows, 128): sample b -> (b//128, b%128).
    # Kept inside this jit; allow_input_fusion lets XLA fuse the pad+transpose
    # into the pallas_call operand instead of materializing an extra HBM copy.
    x_fm = x_pad.T.reshape(D_IN, rows, LANES)

    # Double-buffered input + output tiles; explicit VMEM limit only when a
    # large block_rows pushes past the conservative per-chip defaults (v5e).
    vmem_need = 2 * (D_IN * sb * LANES * 4 + sb * LANES * 4)
    vmem_limit = None
    if vmem_need > 12 * 1024 * 1024:
        vmem_limit = int(min(vmem_need + 4 * 1024 * 1024, 32 * 1024 * 1024))

    out = pl.pallas_call(
        ann_kernel,
        out_shape=jax.ShapeDtypeStruct((rows, LANES), jnp.float32),
        grid=(num_tiles,),
        in_specs=[
            pl.BlockSpec(memory_space=pltpu.MemorySpace.SMEM),      # packed params
            pl.BlockSpec((D_IN, sb, LANES), lambda i: (0, i, 0)),   # x tile
        ],
        out_specs=pl.BlockSpec((sb, LANES), lambda i: (i, 0)),
        compiler_params=pltpu.CompilerParams(
            dimension_semantics=("parallel",),       # megacore sharding on v7x
            allow_input_fusion=[False, True],        # fuse pad+transpose into operand
            vmem_limit_bytes=vmem_limit,
        ),
    )(p_flat, x_fm)

    return out.reshape(b_pad)[:B].reshape(B, 1)


def ann_forward(x, params, *, block_rows=512):
    """x: (B, 12) float32; params: PyTorch-layout weights (out,in) / biases (out,).
    Returns (B, 1) float32.  block_rows: max sublane rows per grid tile
    (multiple of 16); 512 => up to 65536 samples / ~3 MiB of x per tile."""
    return _ann_forward_jit(x, params, block_rows)


# --------------------------------------------------------------- params/ref
def init_params(key):
    """Deterministic init mirroring nn.Linear (weights stored as (out, in))."""
    ks = jax.random.split(key, 6)

    def linear(kw, kb, fan_in, fan_out):
        bound = 1.0 / float(fan_in) ** 0.5
        w = jax.random.uniform(kw, (fan_out, fan_in), jnp.float32, -bound, bound)
        b = jax.random.uniform(kb, (fan_out,), jnp.float32, -bound, bound)
        return w, b

    w1, b1 = linear(ks[0], ks[1], D_IN, D_H1)
    w2, b2 = linear(ks[2], ks[3], D_H1, D_H2)
    w3, b3 = linear(ks[4], ks[5], D_H2, D_OUT)
    return {"w1": w1, "b1": b1, "w2": w2, "b2": b2, "w3": w3, "b3": b3}


def ann_reference(x, p):
    h1 = jax.nn.relu(x @ p["w1"].T + p["b1"])
    h2 = jax.nn.relu(h1 @ p["w2"].T + p["b2"])
    z = h2 @ p["w3"].T + p["b3"]
    return 1.0 / (1.0 + jnp.exp(-z))


# --------------------------------------------------------------------- main
if __name__ == "__main__":
    key = jax.random.PRNGKey(0)
    k_x1, k_x2, k_p = jax.random.split(key, 3)
    params = init_params(k_p)

    # small batch (single tile, single inner sub-chunk)
    B1 = 8
    x1 = jax.random.normal(k_x1, (B1, D_IN), dtype=jnp.float32)
    out1 = jax.block_until_ready(ann_forward(x1, params))
    ref1 = ann_reference(x1, params)
    assert out1.shape == (B1, 1)
    assert jnp.allclose(out1, ref1, atol=1e-5, rtol=1e-5)

    # ragged batch spanning 2 grid tiles (exercises padding, the parallel grid
    # axis, and the in-kernel sub-chunk loop) with a small block_rows
    B2 = 5000
    x2 = jax.random.normal(k_x2, (B2, D_IN), dtype=jnp.float32)
    out2 = jax.block_until_ready(ann_forward(x2, params, block_rows=32))
    ref2 = ann_reference(x2, params)
    assert out2.shape == (B2, 1)
    assert jnp.allclose(out2, ref2, atol=1e-5, rtol=1e-5)

    print("KERNEL_OK")
</pallas_src>

<mosaic_0001>
module attributes {stable_mosaic.version = 11 : i64} {
  func.func @ann_kernel(%arg0: i32, %arg1: memref<128xf32, #tpu.memory_space<smem>>, %arg2: memref<12x16x128xf32, #tpu.memory_space<vmem>>, %arg3: memref<16x128xf32, #tpu.memory_space<vmem>>) attributes {dimension_semantics = [#tpu.dimension_semantics<parallel>], iteration_bounds = array<i64: 1>, scalar_prefetch = 0 : i64, scratch_operands = 0 : i64, tpu.core_type = #tpu.core_type<tc>, window_params = [{transform_indices = @transform_0, window_bounds = array<i64: 128>}, {transform_indices = @transform_1, window_bounds = array<i64: 12, 16, 128>}, {transform_indices = @transform_2, window_bounds = array<i64: 16, 128>}]} {
    %c0 = arith.constant 0 : index
    %0 = memref.load %arg1[%c0] : memref<128xf32, #tpu.memory_space<smem>>
    %c1 = arith.constant 1 : index
    %1 = memref.load %arg1[%c1] : memref<128xf32, #tpu.memory_space<smem>>
    %c2 = arith.constant 2 : index
    %2 = memref.load %arg1[%c2] : memref<128xf32, #tpu.memory_space<smem>>
    %c3 = arith.constant 3 : index
    %3 = memref.load %arg1[%c3] : memref<128xf32, #tpu.memory_space<smem>>
    %c4 = arith.constant 4 : index
    %4 = memref.load %arg1[%c4] : memref<128xf32, #tpu.memory_space<smem>>
    %c5 = arith.constant 5 : index
    %5 = memref.load %arg1[%c5] : memref<128xf32, #tpu.memory_space<smem>>
    %c6 = arith.constant 6 : index
    %6 = memref.load %arg1[%c6] : memref<128xf32, #tpu.memory_space<smem>>
    %c7 = arith.constant 7 : index
    %7 = memref.load %arg1[%c7] : memref<128xf32, #tpu.memory_space<smem>>
    %c8 = arith.constant 8 : index
    %8 = memref.load %arg1[%c8] : memref<128xf32, #tpu.memory_space<smem>>
    %c9 = arith.constant 9 : index
    %9 = memref.load %arg1[%c9] : memref<128xf32, #tpu.memory_space<smem>>
    %c10 = arith.constant 10 : index
    %10 = memref.load %arg1[%c10] : memref<128xf32, #tpu.memory_space<smem>>
    %c11 = arith.constant 11 : index
    %11 = memref.load %arg1[%c11] : memref<128xf32, #tpu.memory_space<smem>>
    %c12 = arith.constant 12 : index
    %12 = memref.load %arg1[%c12] : memref<128xf32, #tpu.memory_space<smem>>
    %c13 = arith.constant 13 : index
    %13 = memref.load %arg1[%c13] : memref<128xf32, #tpu.memory_space<smem>>
    %c14 = arith.constant 14 : index
    %14 = memref.load %arg1[%c14] : memref<128xf32, #tpu.memory_space<smem>>
    %c15 = arith.constant 15 : index
    %15 = memref.load %arg1[%c15] : memref<128xf32, #tpu.memory_space<smem>>
    %c16 = arith.constant 16 : index
    %16 = memref.load %arg1[%c16] : memref<128xf32, #tpu.memory_space<smem>>
    %c17 = arith.constant 17 : index
    %17 = memref.load %arg1[%c17] : memref<128xf32, #tpu.memory_space<smem>>
    %c18 = arith.constant 18 : index
    %18 = memref.load %arg1[%c18] : memref<128xf32, #tpu.memory_space<smem>>
    %c19 = arith.constant 19 : index
    %19 = memref.load %arg1[%c19] : memref<128xf32, #tpu.memory_space<smem>>
    %c20 = arith.constant 20 : index
    %20 = memref.load %arg1[%c20] : memref<128xf32, #tpu.memory_space<smem>>
    %c21 = arith.constant 21 : index
    %21 = memref.load %arg1[%c21] : memref<128xf32, #tpu.memory_space<smem>>
    %c22 = arith.constant 22 : index
    %22 = memref.load %arg1[%c22] : memref<128xf32, #tpu.memory_space<smem>>
    %c23 = arith.constant 23 : index
    %23 = memref.load %arg1[%c23] : memref<128xf32, #tpu.memory_space<smem>>
    %c24 = arith.constant 24 : index
    %24 = memref.load %arg1[%c24] : memref<128xf32, #tpu.memory_space<smem>>
    %c25 = arith.constant 25 : index
    %25 = memref.load %arg1[%c25] : memref<128xf32, #tpu.memory_space<smem>>
    %c26 = arith.constant 26 : index
    %26 = memref.load %arg1[%c26] : memref<128xf32, #tpu.memory_space<smem>>
    %c27 = arith.constant 27 : index
    %27 = memref.load %arg1[%c27] : memref<128xf32, #tpu.memory_space<smem>>
    %c28 = arith.constant 28 : index
    %28 = memref.load %arg1[%c28] : memref<128xf32, #tpu.memory_space<smem>>
    %c29 = arith.constant 29 : index
    %29 = memref.load %arg1[%c29] : memref<128xf32, #tpu.memory_space<smem>>
    %c30 = arith.constant 30 : index
    %30 = memref.load %arg1[%c30] : memref<128xf32, #tpu.memory_space<smem>>
    %c31 = arith.constant 31 : index
    %31 = memref.load %arg1[%c31] : memref<128xf32, #tpu.memory_space<smem>>
    %c32 = arith.constant 32 : index
    %32 = memref.load %arg1[%c32] : memref<128xf32, #tpu.memory_space<smem>>
    %c33 = arith.constant 33 : index
    %33 = memref.load %arg1[%c33] : memref<128xf32, #tpu.memory_space<smem>>
    %c34 = arith.constant 34 : index
    %34 = memref.load %arg1[%c34] : memref<128xf32, #tpu.memory_space<smem>>
    %c35 = arith.constant 35 : index
    %35 = memref.load %arg1[%c35] : memref<128xf32, #tpu.memory_space<smem>>
    %c36 = arith.constant 36 : index
    %36 = memref.load %arg1[%c36] : memref<128xf32, #tpu.memory_space<smem>>
    %c37 = arith.constant 37 : index
    %37 = memref.load %arg1[%c37] : memref<128xf32, #tpu.memory_space<smem>>
    %c38 = arith.constant 38 : index
    %38 = memref.load %arg1[%c38] : memref<128xf32, #tpu.memory_space<smem>>
    %c39 = arith.constant 39 : index
    %39 = memref.load %arg1[%c39] : memref<128xf32, #tpu.memory_space<smem>>
    %c40 = arith.constant 40 : index
    %40 = memref.load %arg1[%c40] : memref<128xf32, #tpu.memory_space<smem>>
    %c41 = arith.constant 41 : index
    %41 = memref.load %arg1[%c41] : memref<128xf32, #tpu.memory_space<smem>>
    %c42 = arith.constant 42 : index
    %42 = memref.load %arg1[%c42] : memref<128xf32, #tpu.memory_space<smem>>
    %c43 = arith.constant 43 : index
    %43 = memref.load %arg1[%c43] : memref<128xf32, #tpu.memory_space<smem>>
    %c44 = arith.constant 44 : index
    %44 = memref.load %arg1[%c44] : memref<128xf32, #tpu.memory_space<smem>>
    %c45 = arith.constant 45 : index
    %45 = memref.load %arg1[%c45] : memref<128xf32, #tpu.memory_space<smem>>
    %c46 = arith.constant 46 : index
    %46 = memref.load %arg1[%c46] : memref<128xf32, #tpu.memory_space<smem>>
    %c47 = arith.constant 47 : index
    %47 = memref.load %arg1[%c47] : memref<128xf32, #tpu.memory_space<smem>>
    %c48 = arith.constant 48 : index
    %48 = memref.load %arg1[%c48] : memref<128xf32, #tpu.memory_space<smem>>
    %c49 = arith.constant 49 : index
    %49 = memref.load %arg1[%c49] : memref<128xf32, #tpu.memory_space<smem>>
    %c50 = arith.constant 50 : index
    %50 = memref.load %arg1[%c50] : memref<128xf32, #tpu.memory_space<smem>>
    %c51 = arith.constant 51 : index
    %51 = memref.load %arg1[%c51] : memref<128xf32, #tpu.memory_space<smem>>
    %c52 = arith.constant 52 : index
    %52 = memref.load %arg1[%c52] : memref<128xf32, #tpu.memory_space<smem>>
    %c53 = arith.constant 53 : index
    %53 = memref.load %arg1[%c53] : memref<128xf32, #tpu.memory_space<smem>>
    %c54 = arith.constant 54 : index
    %54 = memref.load %arg1[%c54] : memref<128xf32, #tpu.memory_space<smem>>
    %c55 = arith.constant 55 : index
    %55 = memref.load %arg1[%c55] : memref<128xf32, #tpu.memory_space<smem>>
    %c56 = arith.constant 56 : index
    %56 = memref.load %arg1[%c56] : memref<128xf32, #tpu.memory_space<smem>>
    %c57 = arith.constant 57 : index
    %57 = memref.load %arg1[%c57] : memref<128xf32, #tpu.memory_space<smem>>
    %c58 = arith.constant 58 : index
    %58 = memref.load %arg1[%c58] : memref<128xf32, #tpu.memory_space<smem>>
    %c59 = arith.constant 59 : index
    %59 = memref.load %arg1[%c59] : memref<128xf32, #tpu.memory_space<smem>>
    %c60 = arith.constant 60 : index
    %60 = memref.load %arg1[%c60] : memref<128xf32, #tpu.memory_space<smem>>
    %c61 = arith.constant 61 : index
    %61 = memref.load %arg1[%c61] : memref<128xf32, #tpu.memory_space<smem>>
    %c62 = arith.constant 62 : index
    %62 = memref.load %arg1[%c62] : memref<128xf32, #tpu.memory_space<smem>>
    %c63 = arith.constant 63 : index
    %63 = memref.load %arg1[%c63] : memref<128xf32, #tpu.memory_space<smem>>
    %c64 = arith.constant 64 : index
    %64 = memref.load %arg1[%c64] : memref<128xf32, #tpu.memory_space<smem>>
    %c65 = arith.constant 65 : index
    %65 = memref.load %arg1[%c65] : memref<128xf32, #tpu.memory_space<smem>>
    %c66 = arith.constant 66 : index
    %66 = memref.load %arg1[%c66] : memref<128xf32, #tpu.memory_space<smem>>
    %c67 = arith.constant 67 : index
    %67 = memref.load %arg1[%c67] : memref<128xf32, #tpu.memory_space<smem>>
    %c68 = arith.constant 68 : index
    %68 = memref.load %arg1[%c68] : memref<128xf32, #tpu.memory_space<smem>>
    %c69 = arith.constant 69 : index
    %69 = memref.load %arg1[%c69] : memref<128xf32, #tpu.memory_space<smem>>
    %c70 = arith.constant 70 : index
    %70 = memref.load %arg1[%c70] : memref<128xf32, #tpu.memory_space<smem>>
    %c71 = arith.constant 71 : index
    %71 = memref.load %arg1[%c71] : memref<128xf32, #tpu.memory_space<smem>>
    %c72 = arith.constant 72 : index
    %72 = memref.load %arg1[%c72] : memref<128xf32, #tpu.memory_space<smem>>
    %c73 = arith.constant 73 : index
    %73 = memref.load %arg1[%c73] : memref<128xf32, #tpu.memory_space<smem>>
    %c74 = arith.constant 74 : index
    %74 = memref.load %arg1[%c74] : memref<128xf32, #tpu.memory_space<smem>>
    %c75 = arith.constant 75 : index
    %75 = memref.load %arg1[%c75] : memref<128xf32, #tpu.memory_space<smem>>
    %c76 = arith.constant 76 : index
    %76 = memref.load %arg1[%c76] : memref<128xf32, #tpu.memory_space<smem>>
    %c77 = arith.constant 77 : index
    %77 = memref.load %arg1[%c77] : memref<128xf32, #tpu.memory_space<smem>>
    %c78 = arith.constant 78 : index
    %78 = memref.load %arg1[%c78] : memref<128xf32, #tpu.memory_space<smem>>
    %c79 = arith.constant 79 : index
    %79 = memref.load %arg1[%c79] : memref<128xf32, #tpu.memory_space<smem>>
    %c80 = arith.constant 80 : index
    %80 = memref.load %arg1[%c80] : memref<128xf32, #tpu.memory_space<smem>>
    %c81 = arith.constant 81 : index
    %81 = memref.load %arg1[%c81] : memref<128xf32, #tpu.memory_space<smem>>
    %c82 = arith.constant 82 : index
    %82 = memref.load %arg1[%c82] : memref<128xf32, #tpu.memory_space<smem>>
    %c83 = arith.constant 83 : index
    %83 = memref.load %arg1[%c83] : memref<128xf32, #tpu.memory_space<smem>>
    %c84 = arith.constant 84 : index
    %84 = memref.load %arg1[%c84] : memref<128xf32, #tpu.memory_space<smem>>
    %c85 = arith.constant 85 : index
    %85 = memref.load %arg1[%c85] : memref<128xf32, #tpu.memory_space<smem>>
    %c86 = arith.constant 86 : index
    %86 = memref.load %arg1[%c86] : memref<128xf32, #tpu.memory_space<smem>>
    %c87 = arith.constant 87 : index
    %87 = memref.load %arg1[%c87] : memref<128xf32, #tpu.memory_space<smem>>
    %c88 = arith.constant 88 : index
    %88 = memref.load %arg1[%c88] : memref<128xf32, #tpu.memory_space<smem>>
    %c89 = arith.constant 89 : index
    %89 = memref.load %arg1[%c89] : memref<128xf32, #tpu.memory_space<smem>>
    %c90 = arith.constant 90 : index
    %90 = memref.load %arg1[%c90] : memref<128xf32, #tpu.memory_space<smem>>
    %c91 = arith.constant 91 : index
    %91 = memref.load %arg1[%c91] : memref<128xf32, #tpu.memory_space<smem>>
    %c92 = arith.constant 92 : index
    %92 = memref.load %arg1[%c92] : memref<128xf32, #tpu.memory_space<smem>>
    %c93 = arith.constant 93 : index
    %93 = memref.load %arg1[%c93] : memref<128xf32, #tpu.memory_space<smem>>
    %c94 = arith.constant 94 : index
    %94 = memref.load %arg1[%c94] : memref<128xf32, #tpu.memory_space<smem>>
    %c95 = arith.constant 95 : index
    %95 = memref.load %arg1[%c95] : memref<128xf32, #tpu.memory_space<smem>>
    %c96 = arith.constant 96 : index
    %96 = memref.load %arg1[%c96] : memref<128xf32, #tpu.memory_space<smem>>
    %c97 = arith.constant 97 : index
    %97 = memref.load %arg1[%c97] : memref<128xf32, #tpu.memory_space<smem>>
    %c98 = arith.constant 98 : index
    %98 = memref.load %arg1[%c98] : memref<128xf32, #tpu.memory_space<smem>>
    %c99 = arith.constant 99 : index
    %99 = memref.load %arg1[%c99] : memref<128xf32, #tpu.memory_space<smem>>
    %c100 = arith.constant 100 : index
    %100 = memref.load %arg1[%c100] : memref<128xf32, #tpu.memory_space<smem>>
    %c101 = arith.constant 101 : index
    %101 = memref.load %arg1[%c101] : memref<128xf32, #tpu.memory_space<smem>>
    %c102 = arith.constant 102 : index
    %102 = memref.load %arg1[%c102] : memref<128xf32, #tpu.memory_space<smem>>
    %c103 = arith.constant 103 : index
    %103 = memref.load %arg1[%c103] : memref<128xf32, #tpu.memory_space<smem>>
    %c104 = arith.constant 104 : index
    %104 = memref.load %arg1[%c104] : memref<128xf32, #tpu.memory_space<smem>>
    %c105 = arith.constant 105 : index
    %105 = memref.load %arg1[%c105] : memref<128xf32, #tpu.memory_space<smem>>
    %c106 = arith.constant 106 : index
    %106 = memref.load %arg1[%c106] : memref<128xf32, #tpu.memory_space<smem>>
    %c107 = arith.constant 107 : index
    %107 = memref.load %arg1[%c107] : memref<128xf32, #tpu.memory_space<smem>>
    %c108 = arith.constant 108 : index
    %108 = memref.load %arg1[%c108] : memref<128xf32, #tpu.memory_space<smem>>
    %c109 = arith.constant 109 : index
    %109 = memref.load %arg1[%c109] : memref<128xf32, #tpu.memory_space<smem>>
    %c110 = arith.constant 110 : index
    %110 = memref.load %arg1[%c110] : memref<128xf32, #tpu.memory_space<smem>>
    %c111 = arith.constant 111 : index
    %111 = memref.load %arg1[%c111] : memref<128xf32, #tpu.memory_space<smem>>
    %c112 = arith.constant 112 : index
    %112 = memref.load %arg1[%c112] : memref<128xf32, #tpu.memory_space<smem>>
    %c113 = arith.constant 113 : index
    %113 = memref.load %arg1[%c113] : memref<128xf32, #tpu.memory_space<smem>>
    %c114 = arith.constant 114 : index
    %114 = memref.load %arg1[%c114] : memref<128xf32, #tpu.memory_space<smem>>
    %c115 = arith.constant 115 : index
    %115 = memref.load %arg1[%c115] : memref<128xf32, #tpu.memory_space<smem>>
    %c116 = arith.constant 116 : index
    %116 = memref.load %arg1[%c116] : memref<128xf32, #tpu.memory_space<smem>>
    %c117 = arith.constant 117 : index
    %117 = memref.load %arg1[%c117] : memref<128xf32, #tpu.memory_space<smem>>
    %c118 = arith.constant 118 : index
    %118 = memref.load %arg1[%c118] : memref<128xf32, #tpu.memory_space<smem>>
    %c119 = arith.constant 119 : index
    %119 = memref.load %arg1[%c119] : memref<128xf32, #tpu.memory_space<smem>>
    %c120 = arith.constant 120 : index
    %120 = memref.load %arg1[%c120] : memref<128xf32, #tpu.memory_space<smem>>
    %c121 = arith.constant 121 : index
    %121 = memref.load %arg1[%c121] : memref<128xf32, #tpu.memory_space<smem>>
    %c122 = arith.constant 122 : index
    %122 = memref.load %arg1[%c122] : memref<128xf32, #tpu.memory_space<smem>>
    %c123 = arith.constant 123 : index
    %123 = memref.load %arg1[%c123] : memref<128xf32, #tpu.memory_space<smem>>
    %c124 = arith.constant 124 : index
    %124 = memref.load %arg1[%c124] : memref<128xf32, #tpu.memory_space<smem>>
    %c125 = arith.constant 125 : index
    %125 = memref.load %arg1[%c125] : memref<128xf32, #tpu.memory_space<smem>>
    %c126 = arith.constant 126 : index
    %126 = memref.load %arg1[%c126] : memref<128xf32, #tpu.memory_space<smem>>
    %c0_i32 = arith.constant 0 : i32
    %c1_i32 = arith.constant 1 : i32
    %127 = arith.muli %c0_i32, %c1_i32 : i32
    %c0_i32_0 = arith.constant 0 : i32
    %128 = arith.addi %c0_i32_0, %127 : i32
    %c16_i32 = arith.constant 16 : i32
    %129 = arith.muli %128, %c16_i32 : i32
    %130 = tpu.assume_multiple %129, 16 : i32
    %c0_1 = arith.constant 0 : index
    %131 = arith.index_cast %130 : i32 to index
    %c0_2 = arith.constant 0 : index
    %132 = vector.load %arg2[%c0_1, %131, %c0_2] : memref<12x16x128xf32, #tpu.memory_space<vmem>>, vector<1x16x128xf32>
    %133 = vector.shape_cast %132 : vector<1x16x128xf32> to vector<16x128xf32>
    %134 = vector.broadcast %0 : f32 to vector<16x128xf32>
    %135 = arith.mulf %133, %134 : vector<16x128xf32>
    %136 = vector.broadcast %12 : f32 to vector<16x128xf32>
    %137 = arith.mulf %133, %136 : vector<16x128xf32>
    %138 = vector.broadcast %24 : f32 to vector<16x128xf32>
    %139 = arith.mulf %133, %138 : vector<16x128xf32>
    %140 = vector.broadcast %36 : f32 to vector<16x128xf32>
    %141 = arith.mulf %133, %140 : vector<16x128xf32>
    %142 = vector.broadcast %48 : f32 to vector<16x128xf32>
    %143 = arith.mulf %133, %142 : vector<16x128xf32>
    %144 = vector.broadcast %60 : f32 to vector<16x128xf32>
    %145 = arith.mulf %133, %144 : vector<16x128xf32>
    %c1_3 = arith.constant 1 : index
    %146 = arith.index_cast %130 : i32 to index
    %c0_4 = arith.constant 0 : index
    %147 = vector.load %arg2[%c1_3, %146, %c0_4] : memref<12x16x128xf32, #tpu.memory_space<vmem>>, vector<1x16x128xf32>
    %148 = vector.shape_cast %147 : vector<1x16x128xf32> to vector<16x128xf32>
    %149 = vector.broadcast %1 : f32 to vector<16x128xf32>
    %150 = arith.mulf %148, %149 : vector<16x128xf32>
    %151 = arith.addf %135, %150 : vector<16x128xf32>
    %152 = vector.broadcast %13 : f32 to vector<16x128xf32>
    %153 = arith.mulf %148, %152 : vector<16x128xf32>
    %154 = arith.addf %137, %153 : vector<16x128xf32>
    %155 = vector.broadcast %25 : f32 to vector<16x128xf32>
    %156 = arith.mulf %148, %155 : vector<16x128xf32>
    %157 = arith.addf %139, %156 : vector<16x128xf32>
    %158 = vector.broadcast %37 : f32 to vector<16x128xf32>
    %159 = arith.mulf %148, %158 : vector<16x128xf32>
    %160 = arith.addf %141, %159 : vector<16x128xf32>
    %161 = vector.broadcast %49 : f32 to vector<16x128xf32>
    %162 = arith.mulf %148, %161 : vector<16x128xf32>
    %163 = arith.addf %143, %162 : vector<16x128xf32>
    %164 = vector.broadcast %61 : f32 to vector<16x128xf32>
    %165 = arith.mulf %148, %164 : vector<16x128xf32>
    %166 = arith.addf %145, %165 : vector<16x128xf32>
    %c2_5 = arith.constant 2 : index
    %167 = arith.index_cast %130 : i32 to index
    %c0_6 = arith.constant 0 : index
    %168 = vector.load %arg2[%c2_5, %167, %c0_6] : memref<12x16x128xf32, #tpu.memory_space<vmem>>, vector<1x16x128xf32>
    %169 = vector.shape_cast %168 : vector<1x16x128xf32> to vector<16x128xf32>
    %170 = vector.broadcast %2 : f32 to vector<16x128xf32>
    %171 = arith.mulf %169, %170 : vector<16x128xf32>
    %172 = arith.addf %151, %171 : vector<16x128xf32>
    %173 = vector.broadcast %14 : f32 to vector<16x128xf32>
    %174 = arith.mulf %169, %173 : vector<16x128xf32>
    %175 = arith.addf %154, %174 : vector<16x128xf32>
    %176 = vector.broadcast %26 : f32 to vector<16x128xf32>
    %177 = arith.mulf %169, %176 : vector<16x128xf32>
    %178 = arith.addf %157, %177 : vector<16x128xf32>
    %179 = vector.broadcast %38 : f32 to vector<16x128xf32>
    %180 = arith.mulf %169, %179 : vector<16x128xf32>
    %181 = arith.addf %160, %180 : vector<16x128xf32>
    %182 = vector.broadcast %50 : f32 to vector<16x128xf32>
    %183 = arith.mulf %169, %182 : vector<16x128xf32>
    %184 = arith.addf %163, %183 : vector<16x128xf32>
    %185 = vector.broadcast %62 : f32 to vector<16x128xf32>
    %186 = arith.mulf %169, %185 : vector<16x128xf32>
    %187 = arith.addf %166, %186 : vector<16x128xf32>
    %c3_7 = arith.constant 3 : index
    %188 = arith.index_cast %130 : i32 to index
    %c0_8 = arith.constant 0 : index
    %189 = vector.load %arg2[%c3_7, %188, %c0_8] : memref<12x16x128xf32, #tpu.memory_space<vmem>>, vector<1x16x128xf32>
    %190 = vector.shape_cast %189 : vector<1x16x128xf32> to vector<16x128xf32>
    %191 = vector.broadcast %3 : f32 to vector<16x128xf32>
    %192 = arith.mulf %190, %191 : vector<16x128xf32>
    %193 = arith.addf %172, %192 : vector<16x128xf32>
    %194 = vector.broadcast %15 : f32 to vector<16x128xf32>
    %195 = arith.mulf %190, %194 : vector<16x128xf32>
    %196 = arith.addf %175, %195 : vector<16x128xf32>
    %197 = vector.broadcast %27 : f32 to vector<16x128xf32>
    %198 = arith.mulf %190, %197 : vector<16x128xf32>
    %199 = arith.addf %178, %198 : vector<16x128xf32>
    %200 = vector.broadcast %39 : f32 to vector<16x128xf32>
    %201 = arith.mulf %190, %200 : vector<16x128xf32>
    %202 = arith.addf %181, %201 : vector<16x128xf32>
    %203 = vector.broadcast %51 : f32 to vector<16x128xf32>
    %204 = arith.mulf %190, %203 : vector<16x128xf32>
    %205 = arith.addf %184, %204 : vector<16x128xf32>
    %206 = vector.broadcast %63 : f32 to vector<16x128xf32>
    %207 = arith.mulf %190, %206 : vector<16x128xf32>
    %208 = arith.addf %187, %207 : vector<16x128xf32>
    %c4_9 = arith.constant 4 : index
    %209 = arith.index_cast %130 : i32 to index
    %c0_10 = arith.constant 0 : index
    %210 = vector.load %arg2[%c4_9, %209, %c0_10] : memref<12x16x128xf32, #tpu.memory_space<vmem>>, vector<1x16x128xf32>
    %211 = vector.shape_cast %210 : vector<1x16x128xf32> to vector<16x128xf32>
    %212 = vector.broadcast %4 : f32 to vector<16x128xf32>
    %213 = arith.mulf %211, %212 : vector<16x128xf32>
    %214 = arith.addf %193, %213 : vector<16x128xf32>
    %215 = vector.broadcast %16 : f32 to vector<16x128xf32>
    %216 = arith.mulf %211, %215 : vector<16x128xf32>
    %217 = arith.addf %196, %216 : vector<16x128xf32>
    %218 = vector.broadcast %28 : f32 to vector<16x128xf32>
    %219 = arith.mulf %211, %218 : vector<16x128xf32>
    %220 = arith.addf %199, %219 : vector<16x128xf32>
    %221 = vector.broadcast %40 : f32 to vector<16x128xf32>
    %222 = arith.mulf %211, %221 : vector<16x128xf32>
    %223 = arith.addf %202, %222 : vector<16x128xf32>
    %224 = vector.broadcast %52 : f32 to vector<16x128xf32>
    %225 = arith.mulf %211, %224 : vector<16x128xf32>
    %226 = arith.addf %205, %225 : vector<16x128xf32>
    %227 = vector.broadcast %64 : f32 to vector<16x128xf32>
    %228 = arith.mulf %211, %227 : vector<16x128xf32>
    %229 = arith.addf %208, %228 : vector<16x128xf32>
    %c5_11 = arith.constant 5 : index
    %230 = arith.index_cast %130 : i32 to index
    %c0_12 = arith.constant 0 : index
    %231 = vector.load %arg2[%c5_11, %230, %c0_12] : memref<12x16x128xf32, #tpu.memory_space<vmem>>, vector<1x16x128xf32>
    %232 = vector.shape_cast %231 : vector<1x16x128xf32> to vector<16x128xf32>
    %233 = vector.broadcast %5 : f32 to vector<16x128xf32>
    %234 = arith.mulf %232, %233 : vector<16x128xf32>
    %235 = arith.addf %214, %234 : vector<16x128xf32>
    %236 = vector.broadcast %17 : f32 to vector<16x128xf32>
    %237 = arith.mulf %232, %236 : vector<16x128xf32>
    %238 = arith.addf %217, %237 : vector<16x128xf32>
    %239 = vector.broadcast %29 : f32 to vector<16x128xf32>
    %240 = arith.mulf %232, %239 : vector<16x128xf32>
    %241 = arith.addf %220, %240 : vector<16x128xf32>
    %242 = vector.broadcast %41 : f32 to vector<16x128xf32>
    %243 = arith.mulf %232, %242 : vector<16x128xf32>
    %244 = arith.addf %223, %243 : vector<16x128xf32>
    %245 = vector.broadcast %53 : f32 to vector<16x128xf32>
    %246 = arith.mulf %232, %245 : vector<16x128xf32>
    %247 = arith.addf %226, %246 : vector<16x128xf32>
    %248 = vector.broadcast %65 : f32 to vector<16x128xf32>
    %249 = arith.mulf %232, %248 : vector<16x128xf32>
    %250 = arith.addf %229, %249 : vector<16x128xf32>
    %c6_13 = arith.constant 6 : index
    %251 = arith.index_cast %130 : i32 to index
    %c0_14 = arith.constant 0 : index
    %252 = vector.load %arg2[%c6_13, %251, %c0_14] : memref<12x16x128xf32, #tpu.memory_space<vmem>>, vector<1x16x128xf32>
    %253 = vector.shape_cast %252 : vector<1x16x128xf32> to vector<16x128xf32>
    %254 = vector.broadcast %6 : f32 to vector<16x128xf32>
    %255 = arith.mulf %253, %254 : vector<16x128xf32>
    %256 = arith.addf %235, %255 : vector<16x128xf32>
    %257 = vector.broadcast %18 : f32 to vector<16x128xf32>
    %258 = arith.mulf %253, %257 : vector<16x128xf32>
    %259 = arith.addf %238, %258 : vector<16x128xf32>
    %260 = vector.broadcast %30 : f32 to vector<16x128xf32>
    %261 = arith.mulf %253, %260 : vector<16x128xf32>
    %262 = arith.addf %241, %261 : vector<16x128xf32>
    %263 = vector.broadcast %42 : f32 to vector<16x128xf32>
    %264 = arith.mulf %253, %263 : vector<16x128xf32>
    %265 = arith.addf %244, %264 : vector<16x128xf32>
    %266 = vector.broadcast %54 : f32 to vector<16x128xf32>
    %267 = arith.mulf %253, %266 : vector<16x128xf32>
    %268 = arith.addf %247, %267 : vector<16x128xf32>
    %269 = vector.broadcast %66 : f32 to vector<16x128xf32>
    %270 = arith.mulf %253, %269 : vector<16x128xf32>
    %271 = arith.addf %250, %270 : vector<16x128xf32>
    %c7_15 = arith.constant 7 : index
    %272 = arith.index_cast %130 : i32 to index
    %c0_16 = arith.constant 0 : index
    %273 = vector.load %arg2[%c7_15, %272, %c0_16] : memref<12x16x128xf32, #tpu.memory_space<vmem>>, vector<1x16x128xf32>
    %274 = vector.shape_cast %273 : vector<1x16x128xf32> to vector<16x128xf32>
    %275 = vector.broadcast %7 : f32 to vector<16x128xf32>
    %276 = arith.mulf %274, %275 : vector<16x128xf32>
    %277 = arith.addf %256, %276 : vector<16x128xf32>
    %278 = vector.broadcast %19 : f32 to vector<16x128xf32>
    %279 = arith.mulf %274, %278 : vector<16x128xf32>
    %280 = arith.addf %259, %279 : vector<16x128xf32>
    %281 = vector.broadcast %31 : f32 to vector<16x128xf32>
    %282 = arith.mulf %274, %281 : vector<16x128xf32>
    %283 = arith.addf %262, %282 : vector<16x128xf32>
    %284 = vector.broadcast %43 : f32 to vector<16x128xf32>
    %285 = arith.mulf %274, %284 : vector<16x128xf32>
    %286 = arith.addf %265, %285 : vector<16x128xf32>
    %287 = vector.broadcast %55 : f32 to vector<16x128xf32>
    %288 = arith.mulf %274, %287 : vector<16x128xf32>
    %289 = arith.addf %268, %288 : vector<16x128xf32>
    %290 = vector.broadcast %67 : f32 to vector<16x128xf32>
    %291 = arith.mulf %274, %290 : vector<16x128xf32>
    %292 = arith.addf %271, %291 : vector<16x128xf32>
    %c8_17 = arith.constant 8 : index
    %293 = arith.index_cast %130 : i32 to index
    %c0_18 = arith.constant 0 : index
    %294 = vector.load %arg2[%c8_17, %293, %c0_18] : memref<12x16x128xf32, #tpu.memory_space<vmem>>, vector<1x16x128xf32>
    %295 = vector.shape_cast %294 : vector<1x16x128xf32> to vector<16x128xf32>
    %296 = vector.broadcast %8 : f32 to vector<16x128xf32>
    %297 = arith.mulf %295, %296 : vector<16x128xf32>
    %298 = arith.addf %277, %297 : vector<16x128xf32>
    %299 = vector.broadcast %20 : f32 to vector<16x128xf32>
    %300 = arith.mulf %295, %299 : vector<16x128xf32>
    %301 = arith.addf %280, %300 : vector<16x128xf32>
    %302 = vector.broadcast %32 : f32 to vector<16x128xf32>
    %303 = arith.mulf %295, %302 : vector<16x128xf32>
    %304 = arith.addf %283, %303 : vector<16x128xf32>
    %305 = vector.broadcast %44 : f32 to vector<16x128xf32>
    %306 = arith.mulf %295, %305 : vector<16x128xf32>
    %307 = arith.addf %286, %306 : vector<16x128xf32>
    %308 = vector.broadcast %56 : f32 to vector<16x128xf32>
    %309 = arith.mulf %295, %308 : vector<16x128xf32>
    %310 = arith.addf %289, %309 : vector<16x128xf32>
    %311 = vector.broadcast %68 : f32 to vector<16x128xf32>
    %312 = arith.mulf %295, %311 : vector<16x128xf32>
    %313 = arith.addf %292, %312 : vector<16x128xf32>
    %c9_19 = arith.constant 9 : index
    %314 = arith.index_cast %130 : i32 to index
    %c0_20 = arith.constant 0 : index
    %315 = vector.load %arg2[%c9_19, %314, %c0_20] : memref<12x16x128xf32, #tpu.memory_space<vmem>>, vector<1x16x128xf32>
    %316 = vector.shape_cast %315 : vector<1x16x128xf32> to vector<16x128xf32>
    %317 = vector.broadcast %9 : f32 to vector<16x128xf32>
    %318 = arith.mulf %316, %317 : vector<16x128xf32>
    %319 = arith.addf %298, %318 : vector<16x128xf32>
    %320 = vector.broadcast %21 : f32 to vector<16x128xf32>
    %321 = arith.mulf %316, %320 : vector<16x128xf32>
    %322 = arith.addf %301, %321 : vector<16x128xf32>
    %323 = vector.broadcast %33 : f32 to vector<16x128xf32>
    %324 = arith.mulf %316, %323 : vector<16x128xf32>
    %325 = arith.addf %304, %324 : vector<16x128xf32>
    %326 = vector.broadcast %45 : f32 to vector<16x128xf32>
    %327 = arith.mulf %316, %326 : vector<16x128xf32>
    %328 = arith.addf %307, %327 : vector<16x128xf32>
    %329 = vector.broadcast %57 : f32 to vector<16x128xf32>
    %330 = arith.mulf %316, %329 : vector<16x128xf32>
    %331 = arith.addf %310, %330 : vector<16x128xf32>
    %332 = vector.broadcast %69 : f32 to vector<16x128xf32>
    %333 = arith.mulf %316, %332 : vector<16x128xf32>
    %334 = arith.addf %313, %333 : vector<16x128xf32>
    %c10_21 = arith.constant 10 : index
    %335 = arith.index_cast %130 : i32 to index
    %c0_22 = arith.constant 0 : index
    %336 = vector.load %arg2[%c10_21, %335, %c0_22] : memref<12x16x128xf32, #tpu.memory_space<vmem>>, vector<1x16x128xf32>
    %337 = vector.shape_cast %336 : vector<1x16x128xf32> to vector<16x128xf32>
    %338 = vector.broadcast %10 : f32 to vector<16x128xf32>
    %339 = arith.mulf %337, %338 : vector<16x128xf32>
    %340 = arith.addf %319, %339 : vector<16x128xf32>
    %341 = vector.broadcast %22 : f32 to vector<16x128xf32>
    %342 = arith.mulf %337, %341 : vector<16x128xf32>
    %343 = arith.addf %322, %342 : vector<16x128xf32>
    %344 = vector.broadcast %34 : f32 to vector<16x128xf32>
    %345 = arith.mulf %337, %344 : vector<16x128xf32>
    %346 = arith.addf %325, %345 : vector<16x128xf32>
    %347 = vector.broadcast %46 : f32 to vector<16x128xf32>
    %348 = arith.mulf %337, %347 : vector<16x128xf32>
    %349 = arith.addf %328, %348 : vector<16x128xf32>
    %350 = vector.broadcast %58 : f32 to vector<16x128xf32>
    %351 = arith.mulf %337, %350 : vector<16x128xf32>
    %352 = arith.addf %331, %351 : vector<16x128xf32>
    %353 = vector.broadcast %70 : f32 to vector<16x128xf32>
    %354 = arith.mulf %337, %353 : vector<16x128xf32>
    %355 = arith.addf %334, %354 : vector<16x128xf32>
    %c11_23 = arith.constant 11 : index
    %356 = arith.index_cast %130 : i32 to index
    %c0_24 = arith.constant 0 : index
    %357 = vector.load %arg2[%c11_23, %356, %c0_24] : memref<12x16x128xf32, #tpu.memory_space<vmem>>, vector<1x16x128xf32>
    %358 = vector.shape_cast %357 : vector<1x16x128xf32> to vector<16x128xf32>
    %359 = vector.broadcast %11 : f32 to vector<16x128xf32>
    %360 = arith.mulf %358, %359 : vector<16x128xf32>
    %361 = arith.addf %340, %360 : vector<16x128xf32>
    %362 = vector.broadcast %23 : f32 to vector<16x128xf32>
    %363 = arith.mulf %358, %362 : vector<16x128xf32>
    %364 = arith.addf %343, %363 : vector<16x128xf32>
    %365 = vector.broadcast %35 : f32 to vector<16x128xf32>
    %366 = arith.mulf %358, %365 : vector<16x128xf32>
    %367 = arith.addf %346, %366 : vector<16x128xf32>
    %368 = vector.broadcast %47 : f32 to vector<16x128xf32>
    %369 = arith.mulf %358, %368 : vector<16x128xf32>
    %370 = arith.addf %349, %369 : vector<16x128xf32>
    %371 = vector.broadcast %59 : f32 to vector<16x128xf32>
    %372 = arith.mulf %358, %371 : vector<16x128xf32>
    %373 = arith.addf %352, %372 : vector<16x128xf32>
    %374 = vector.broadcast %71 : f32 to vector<16x128xf32>
    %375 = arith.mulf %358, %374 : vector<16x128xf32>
    %376 = arith.addf %355, %375 : vector<16x128xf32>
    %377 = vector.broadcast %72 : f32 to vector<16x128xf32>
    %378 = arith.addf %361, %377 : vector<16x128xf32>
    %cst = arith.constant 0.000000e+00 : f32
    %379 = vector.broadcast %cst : f32 to vector<16x128xf32>
    %380 = arith.maximumf %378, %379 : vector<16x128xf32>
    %381 = vector.broadcast %73 : f32 to vector<16x128xf32>
    %382 = arith.addf %364, %381 : vector<16x128xf32>
    %cst_25 = arith.constant 0.000000e+00 : f32
    %383 = vector.broadcast %cst_25 : f32 to vector<16x128xf32>
    %384 = arith.maximumf %382, %383 : vector<16x128xf32>
    %385 = vector.broadcast %74 : f32 to vector<16x128xf32>
    %386 = arith.addf %367, %385 : vector<16x128xf32>
    %cst_26 = arith.constant 0.000000e+00 : f32
    %387 = vector.broadcast %cst_26 : f32 to vector<16x128xf32>
    %388 = arith.maximumf %386, %387 : vector<16x128xf32>
    %389 = vector.broadcast %75 : f32 to vector<16x128xf32>
    %390 = arith.addf %370, %389 : vector<16x128xf32>
    %cst_27 = arith.constant 0.000000e+00 : f32
    %391 = vector.broadcast %cst_27 : f32 to vector<16x128xf32>
    %392 = arith.maximumf %390, %391 : vector<16x128xf32>
    %393 = vector.broadcast %76 : f32 to vector<16x128xf32>
    %394 = arith.addf %373, %393 : vector<16x128xf32>
    %cst_28 = arith.constant 0.000000e+00 : f32
    %395 = vector.broadcast %cst_28 : f32 to vector<16x128xf32>
    %396 = arith.maximumf %394, %395 : vector<16x128xf32>
    %397 = vector.broadcast %77 : f32 to vector<16x128xf32>
    %398 = arith.addf %376, %397 : vector<16x128xf32>
    %cst_29 = arith.constant 0.000000e+00 : f32
    %399 = vector.broadcast %cst_29 : f32 to vector<16x128xf32>
    %400 = arith.maximumf %398, %399 : vector<16x128xf32>
    %401 = vector.broadcast %78 : f32 to vector<16x128xf32>
    %402 = arith.mulf %380, %401 : vector<16x128xf32>
    %403 = vector.broadcast %84 : f32 to vector<16x128xf32>
    %404 = arith.mulf %380, %403 : vector<16x128xf32>
    %405 = vector.broadcast %90 : f32 to vector<16x128xf32>
    %406 = arith.mulf %380, %405 : vector<16x128xf32>
    %407 = vector.broadcast %96 : f32 to vector<16x128xf32>
    %408 = arith.mulf %380, %407 : vector<16x128xf32>
    %409 = vector.broadcast %102 : f32 to vector<16x128xf32>
    %410 = arith.mulf %380, %409 : vector<16x128xf32>
    %411 = vector.broadcast %108 : f32 to vector<16x128xf32>
    %412 = arith.mulf %380, %411 : vector<16x128xf32>
    %413 = vector.broadcast %79 : f32 to vector<16x128xf32>
    %414 = arith.mulf %384, %413 : vector<16x128xf32>
    %415 = arith.addf %402, %414 : vector<16x128xf32>
    %416 = vector.broadcast %85 : f32 to vector<16x128xf32>
    %417 = arith.mulf %384, %416 : vector<16x128xf32>
    %418 = arith.addf %404, %417 : vector<16x128xf32>
    %419 = vector.broadcast %91 : f32 to vector<16x128xf32>
    %420 = arith.mulf %384, %419 : vector<16x128xf32>
    %421 = arith.addf %406, %420 : vector<16x128xf32>
    %422 = vector.broadcast %97 : f32 to vector<16x128xf32>
    %423 = arith.mulf %384, %422 : vector<16x128xf32>
    %424 = arith.addf %408, %423 : vector<16x128xf32>
    %425 = vector.broadcast %103 : f32 to vector<16x128xf32>
    %426 = arith.mulf %384, %425 : vector<16x128xf32>
    %427 = arith.addf %410, %426 : vector<16x128xf32>
    %428 = vector.broadcast %109 : f32 to vector<16x128xf32>
    %429 = arith.mulf %384, %428 : vector<16x128xf32>
    %430 = arith.addf %412, %429 : vector<16x128xf32>
    %431 = vector.broadcast %80 : f32 to vector<16x128xf32>
    %432 = arith.mulf %388, %431 : vector<16x128xf32>
    %433 = arith.addf %415, %432 : vector<16x128xf32>
    %434 = vector.broadcast %86 : f32 to vector<16x128xf32>
    %435 = arith.mulf %388, %434 : vector<16x128xf32>
    %436 = arith.addf %418, %435 : vector<16x128xf32>
    %437 = vector.broadcast %92 : f32 to vector<16x128xf32>
    %438 = arith.mulf %388, %437 : vector<16x128xf32>
    %439 = arith.addf %421, %438 : vector<16x128xf32>
    %440 = vector.broadcast %98 : f32 to vector<16x128xf32>
    %441 = arith.mulf %388, %440 : vector<16x128xf32>
    %442 = arith.addf %424, %441 : vector<16x128xf32>
    %443 = vector.broadcast %104 : f32 to vector<16x128xf32>
    %444 = arith.mulf %388, %443 : vector<16x128xf32>
    %445 = arith.addf %427, %444 : vector<16x128xf32>
    %446 = vector.broadcast %110 : f32 to vector<16x128xf32>
    %447 = arith.mulf %388, %446 : vector<16x128xf32>
    %448 = arith.addf %430, %447 : vector<16x128xf32>
    %449 = vector.broadcast %81 : f32 to vector<16x128xf32>
    %450 = arith.mulf %392, %449 : vector<16x128xf32>
    %451 = arith.addf %433, %450 : vector<16x128xf32>
    %452 = vector.broadcast %87 : f32 to vector<16x128xf32>
    %453 = arith.mulf %392, %452 : vector<16x128xf32>
    %454 = arith.addf %436, %453 : vector<16x128xf32>
    %455 = vector.broadcast %93 : f32 to vector<16x128xf32>
    %456 = arith.mulf %392, %455 : vector<16x128xf32>
    %457 = arith.addf %439, %456 : vector<16x128xf32>
    %458 = vector.broadcast %99 : f32 to vector<16x128xf32>
    %459 = arith.mulf %392, %458 : vector<16x128xf32>
    %460 = arith.addf %442, %459 : vector<16x128xf32>
    %461 = vector.broadcast %105 : f32 to vector<16x128xf32>
    %462 = arith.mulf %392, %461 : vector<16x128xf32>
    %463 = arith.addf %445, %462 : vector<16x128xf32>
    %464 = vector.broadcast %111 : f32 to vector<16x128xf32>
    %465 = arith.mulf %392, %464 : vector<16x128xf32>
    %466 = arith.addf %448, %465 : vector<16x128xf32>
    %467 = vector.broadcast %82 : f32 to vector<16x128xf32>
    %468 = arith.mulf %396, %467 : vector<16x128xf32>
    %469 = arith.addf %451, %468 : vector<16x128xf32>
    %470 = vector.broadcast %88 : f32 to vector<16x128xf32>
    %471 = arith.mulf %396, %470 : vector<16x128xf32>
    %472 = arith.addf %454, %471 : vector<16x128xf32>
    %473 = vector.broadcast %94 : f32 to vector<16x128xf32>
    %474 = arith.mulf %396, %473 : vector<16x128xf32>
    %475 = arith.addf %457, %474 : vector<16x128xf32>
    %476 = vector.broadcast %100 : f32 to vector<16x128xf32>
    %477 = arith.mulf %396, %476 : vector<16x128xf32>
    %478 = arith.addf %460, %477 : vector<16x128xf32>
    %479 = vector.broadcast %106 : f32 to vector<16x128xf32>
    %480 = arith.mulf %396, %479 : vector<16x128xf32>
    %481 = arith.addf %463, %480 : vector<16x128xf32>
    %482 = vector.broadcast %112 : f32 to vector<16x128xf32>
    %483 = arith.mulf %396, %482 : vector<16x128xf32>
    %484 = arith.addf %466, %483 : vector<16x128xf32>
    %485 = vector.broadcast %83 : f32 to vector<16x128xf32>
    %486 = arith.mulf %400, %485 : vector<16x128xf32>
    %487 = arith.addf %469, %486 : vector<16x128xf32>
    %488 = vector.broadcast %89 : f32 to vector<16x128xf32>
    %489 = arith.mulf %400, %488 : vector<16x128xf32>
    %490 = arith.addf %472, %489 : vector<16x128xf32>
    %491 = vector.broadcast %95 : f32 to vector<16x128xf32>
    %492 = arith.mulf %400, %491 : vector<16x128xf32>
    %493 = arith.addf %475, %492 : vector<16x128xf32>
    %494 = vector.broadcast %101 : f32 to vector<16x128xf32>
    %495 = arith.mulf %400, %494 : vector<16x128xf32>
    %496 = arith.addf %478, %495 : vector<16x128xf32>
    %497 = vector.broadcast %107 : f32 to vector<16x128xf32>
    %498 = arith.mulf %400, %497 : vector<16x128xf32>
    %499 = arith.addf %481, %498 : vector<16x128xf32>
    %500 = vector.broadcast %113 : f32 to vector<16x128xf32>
    %501 = arith.mulf %400, %500 : vector<16x128xf32>
    %502 = arith.addf %484, %501 : vector<16x128xf32>
    %503 = vector.broadcast %114 : f32 to vector<16x128xf32>
    %504 = arith.addf %487, %503 : vector<16x128xf32>
    %cst_30 = arith.constant 0.000000e+00 : f32
    %505 = vector.broadcast %cst_30 : f32 to vector<16x128xf32>
    %506 = arith.maximumf %504, %505 : vector<16x128xf32>
    %507 = vector.broadcast %115 : f32 to vector<16x128xf32>
    %508 = arith.addf %490, %507 : vector<16x128xf32>
    %cst_31 = arith.constant 0.000000e+00 : f32
    %509 = vector.broadcast %cst_31 : f32 to vector<16x128xf32>
    %510 = arith.maximumf %508, %509 : vector<16x128xf32>
    %511 = vector.broadcast %116 : f32 to vector<16x128xf32>
    %512 = arith.addf %493, %511 : vector<16x128xf32>
    %cst_32 = arith.constant 0.000000e+00 : f32
    %513 = vector.broadcast %cst_32 : f32 to vector<16x128xf32>
    %514 = arith.maximumf %512, %513 : vector<16x128xf32>
    %515 = vector.broadcast %117 : f32 to vector<16x128xf32>
    %516 = arith.addf %496, %515 : vector<16x128xf32>
    %cst_33 = arith.constant 0.000000e+00 : f32
    %517 = vector.broadcast %cst_33 : f32 to vector<16x128xf32>
    %518 = arith.maximumf %516, %517 : vector<16x128xf32>
    %519 = vector.broadcast %118 : f32 to vector<16x128xf32>
    %520 = arith.addf %499, %519 : vector<16x128xf32>
    %cst_34 = arith.constant 0.000000e+00 : f32
    %521 = vector.broadcast %cst_34 : f32 to vector<16x128xf32>
    %522 = arith.maximumf %520, %521 : vector<16x128xf32>
    %523 = vector.broadcast %119 : f32 to vector<16x128xf32>
    %524 = arith.addf %502, %523 : vector<16x128xf32>
    %cst_35 = arith.constant 0.000000e+00 : f32
    %525 = vector.broadcast %cst_35 : f32 to vector<16x128xf32>
    %526 = arith.maximumf %524, %525 : vector<16x128xf32>
    %527 = vector.broadcast %120 : f32 to vector<16x128xf32>
    %528 = arith.mulf %506, %527 : vector<16x128xf32>
    %529 = vector.broadcast %121 : f32 to vector<16x128xf32>
    %530 = arith.mulf %510, %529 : vector<16x128xf32>
    %531 = arith.addf %528, %530 : vector<16x128xf32>
    %532 = vector.broadcast %122 : f32 to vector<16x128xf32>
    %533 = arith.mulf %514, %532 : vector<16x128xf32>
    %534 = arith.addf %531, %533 : vector<16x128xf32>
    %535 = vector.broadcast %123 : f32 to vector<16x128xf32>
    %536 = arith.mulf %518, %535 : vector<16x128xf32>
    %537 = arith.addf %534, %536 : vector<16x128xf32>
    %538 = vector.broadcast %124 : f32 to vector<16x128xf32>
    %539 = arith.mulf %522, %538 : vector<16x128xf32>
    %540 = arith.addf %537, %539 : vector<16x128xf32>
    %541 = vector.broadcast %125 : f32 to vector<16x128xf32>
    %542 = arith.mulf %526, %541 : vector<16x128xf32>
    %543 = arith.addf %540, %542 : vector<16x128xf32>
    %544 = vector.broadcast %126 : f32 to vector<16x128xf32>
    %545 = arith.addf %543, %544 : vector<16x128xf32>
    %cst_36 = arith.constant 5.000000e-01 : f32
    %546 = vector.broadcast %cst_36 : f32 to vector<16x128xf32>
    %547 = arith.mulf %546, %545 : vector<16x128xf32>
    %548 = math.tanh %547 : vector<16x128xf32>
    %cst_37 = arith.constant 5.000000e-01 : f32
    %549 = vector.broadcast %cst_37 : f32 to vector<16x128xf32>
    %550 = arith.mulf %549, %548 : vector<16x128xf32>
    %cst_38 = arith.constant 5.000000e-01 : f32
    %551 = vector.broadcast %cst_38 : f32 to vector<16x128xf32>
    %552 = arith.addf %550, %551 : vector<16x128xf32>
    %553 = arith.index_cast %130 : i32 to index
    %c0_39 = arith.constant 0 : index
    %554 = vector.load %arg3[%553, %c0_39] : memref<16x128xf32, #tpu.memory_space<vmem>>, vector<16x128xf32>
    tpu.vector_store %arg3[%553, %c0_39], %552 {strides = array<i32>} : memref<16x128xf32, #tpu.memory_space<vmem>>, vector<16x128xf32>,
    %c1_i32_40 = arith.constant 1 : i32
    return
  }
  func.func @transform_0(%arg0: i32) -> i32 {
    %c0_i32 = arith.constant 0 : i32
    %c0_i32_0 = arith.constant 0 : i32
    return %c0_i32 : i32
  }
  func.func @transform_1(%arg0: i32) -> (i32, i32, i32) {
    %c0_i32 = arith.constant 0 : i32
    %c0_i32_0 = arith.constant 0 : i32
    %c0_i32_1 = arith.constant 0 : i32
    return %c0_i32, %arg0, %c0_i32_0 : i32, i32, i32
  }
  func.func @transform_2(%arg0: i32) -> (i32, i32) {
    %c0_i32 = arith.constant 0 : i32
    %c0_i32_0 = arith.constant 0 : i32
    return %arg0, %c0_i32 : i32, i32
  }
}

</mosaic_0001>

<llo_original>
// kernel: _ann_forward_jit.1
$region0: #{_ann_forward_jit.1}
  #allocation0 [shape = 'u32[]', space=smem, size = 0x4, offset = 0x4, fixed_abs, tag = 'smem constant byte address 0x4 - core index']
  #allocation1 [shape = 'u32[144,128]{1,0:T(1,128)}', space=vmem, size = 0x12000, scoped, tag = 'internal scratch']
  %s0 = inlined_call_operand.vmem [shape: f32[128], index: 0, kind: input, shape index: {}]
  %s1 = inlined_call_operand.vmem [shape: f32[12,16,128], index: 1, kind: input, shape index: {}]
  %s2 = inlined_call_operand.vmem [shape: f32[16,128], index: 2, kind: output, shape index: {}]
  %s3 = sld [smem:[#allocation0]]
  $region22: #{_ann_forward_jit.1} parent=0
    _
  %s5 = ssub.s32 1, %s3
  %s6 = scalar_select 0, %s5, %s3
  $region1: #{_ann_forward_jit.1} parent=0
    #allocation2 [shape = 'u8[512]{0}', space=smem, size = 0x200, scoped, tag = 'input window, operand 0, single buffered']
    #allocation3 [shape = 's32[1]{0}', space=sflag, size = 0x4, scoped, tag = 'scoped memory for _ann_forward_jit.1']
    %7 = vsyncpa [#allocation3], 0
    // Predicated region
    $region2: #{_ann_forward_jit.1} parent=1 // pred_check
      _
    $region3: #{_ann_forward_jit.1} parent=1 // pred_check_branch
      %9 = sbr.rel (0) target = $region5
    $region4: #{_ann_forward_jit.1} parent=1 // pred_region
      %s11 = ssub.s32 16, 16
      %12 = vsyncadd [#allocation3], %s11
      %s14 = sshll.u32 %s0, 4
      %s15 = int_to_ptr.vmem [resolvable:$true] %s14
      %17 = dma.vmem_to_smem %s15, 16, [#allocation2], [#allocation3]
    $region5: #{_ann_forward_jit.1} parent=1 // pred_fallthru
      _
    // Predicated region
    $region6: #{_ann_forward_jit.1} parent=1 // pred_check
      _
    $region7: #{_ann_forward_jit.1} parent=1 // pred_check_branch
      %19 = sbr.rel (0) target = $region9
    $region8: #{_ann_forward_jit.1} parent=1 // pred_region
      _
    $region9: #{_ann_forward_jit.1} parent=1 // pred_fallthru
      _
    // Predicated region
    $region10: #{_ann_forward_jit.1} parent=1 // pred_check
      _
    $region11: #{_ann_forward_jit.1} parent=1 // pred_check_branch
      %21 = sbr.rel (0) target = $region13
    $region12: #{_ann_forward_jit.1} parent=1 // pred_region
      %22 = dma.done [#allocation3], 16
    $region13: #{_ann_forward_jit.1} parent=1 // pred_fallthru
      _
    %23 = sfence
    %s24 = sld [smem:[#allocation2]]
    %s25 = sld [smem:[#allocation2 + $0x1]]
    %s26 = sld [smem:[#allocation2 + $0x2]]
    %s27 = sld [smem:[#allocation2 + $0x3]]
    %s28 = sld [smem:[#allocation2 + $0x4]]
    %s29 = sld [smem:[#allocation2 + $0x5]]
    %s30 = sld [smem:[#allocation2 + $0x6]]
    %s31 = sld [smem:[#allocation2 + $0x7]]
    %s32 = sld [smem:[#allocation2 + $0x8]]
    %s33 = sld [smem:[#allocation2 + $0x9]]
    %s34 = sld [smem:[#allocation2 + $0xa]]
    %s35 = sld [smem:[#allocation2 + $0xb]]
    %s36 = sld [smem:[#allocation2 + $0xc]]
    %s37 = sld [smem:[#allocation2 + $0xd]]
    %s38 = sld [smem:[#allocation2 + $0xe]]
    %s39 = sld [smem:[#allocation2 + $0xf]]
    %s40 = sld [smem:[#allocation2 + $0x10]]
    %s41 = sld [smem:[#allocation2 + $0x11]]
    %s42 = sld [smem:[#allocation2 + $0x12]]
    %s43 = sld [smem:[#allocation2 + $0x13]]
    %s44 = sld [smem:[#allocation2 + $0x14]]
    %s45 = sld [smem:[#allocation2 + $0x15]]
    %s46 = sld [smem:[#allocation2 + $0x16]]
    %s47 = sld [smem:[#allocation2 + $0x17]]
    %s48 = sld [smem:[#allocation2 + $0x18]]
    %s49 = sld [smem:[#allocation2 + $0x19]]
    %s50 = sld [smem:[#allocation2 + $0x1a]]
    %s51 = sld [smem:[#allocation2 + $0x1b]]
    %s52 = sld [smem:[#allocation2 + $0x1c]]
    %s53 = sld [smem:[#allocation2 + $0x1d]]
    %s54 = sld [smem:[#allocation2 + $0x1e]]
    %s55 = sld [smem:[#allocation2 + $0x1f]]
    %s56 = sld [smem:[#allocation2 + $0x20]]
    %s57 = sld [smem:[#allocation2 + $0x21]]
    %s58 = sld [smem:[#allocation2 + $0x22]]
    %s59 = sld [smem:[#allocation2 + $0x23]]
    %s60 = sld [smem:[#allocation2 + $0x24]]
    %s61 = sld [smem:[#allocation2 + $0x25]]
    %s62 = sld [smem:[#allocation2 + $0x26]]
    %s63 = sld [smem:[#allocation2 + $0x27]]
    %s64 = sld [smem:[#allocation2 + $0x28]]
    %s65 = sld [smem:[#allocation2 + $0x29]]
    %s66 = sld [smem:[#allocation2 + $0x2a]]
    %s67 = sld [smem:[#allocation2 + $0x2b]]
    %s68 = sld [smem:[#allocation2 + $0x2c]]
    %s69 = sld [smem:[#allocation2 + $0x2d]]
    %s70 = sld [smem:[#allocation2 + $0x2e]]
    %s71 = sld [smem:[#allocation2 + $0x2f]]
    %s72 = sld [smem:[#allocation2 + $0x30]]
    %s73 = sld [smem:[#allocation2 + $0x31]]
    %s74 = sld [smem:[#allocation2 + $0x32]]
    %s75 = sld [smem:[#allocation2 + $0x33]]
    %s76 = sld [smem:[#allocation2 + $0x34]]
    %s77 = sld [smem:[#allocation2 + $0x35]]
    %s78 = sld [smem:[#allocation2 + $0x36]]
    %s79 = sld [smem:[#allocation2 + $0x37]]
    %s80 = sld [smem:[#allocation2 + $0x38]]
    %s81 = sld [smem:[#allocation2 + $0x39]]
    %s82 = sld [smem:[#allocation2 + $0x3a]]
    %s83 = sld [smem:[#allocation2 + $0x3b]]
    %s84 = sld [smem:[#allocation2 + $0x3c]]
    %s85 = sld [smem:[#allocation2 + $0x3d]]
    %s86 = sld [smem:[#allocation2 + $0x3e]]
    %s87 = sld [smem:[#allocation2 + $0x3f]]
    %s88 = sld [smem:[#allocation2 + $0x40]]
    %s89 = sld [smem:[#allocation2 + $0x41]]
    %s90 = sld [smem:[#allocation2 + $0x42]]
    %s91 = sld [smem:[#allocation2 + $0x43]]
    %s92 = sld [smem:[#allocation2 + $0x44]]
    %s93 = sld [smem:[#allocation2 + $0x45]]
    %s94 = sld [smem:[#allocation2 + $0x46]]
    %s95 = sld [smem:[#allocation2 + $0x47]]
    %s96 = sld [smem:[#allocation2 + $0x48]]
    %s97 = sld [smem:[#allocation2 + $0x49]]
    %s98 = sld [smem:[#allocation2 + $0x4a]]
    %s99 = sld [smem:[#allocation2 + $0x4b]]
    %s100 = sld [smem:[#allocation2 + $0x4c]]
    %s101 = sld [smem:[#allocation2 + $0x4d]]
    %s102 = sld [smem:[#allocation2 + $0x4e]]
    %s103 = sld [smem:[#allocation2 + $0x4f]]
    %s104 = sld [smem:[#allocation2 + $0x50]]
    %s105 = sld [smem:[#allocation2 + $0x51]]
    %s106 = sld [smem:[#allocation2 + $0x52]]
    %s107 = sld [smem:[#allocation2 + $0x53]]
    %s108 = sld [smem:[#allocation2 + $0x54]]
    %s109 = sld [smem:[#allocation2 + $0x55]]
    %s110 = sld [smem:[#allocation2 + $0x56]]
    %s111 = sld [smem:[#allocation2 + $0x57]]
    %s112 = sld [smem:[#allocation2 + $0x58]]
    %s113 = sld [smem:[#allocation2 + $0x59]]
    %s114 = sld [smem:[#allocation2 + $0x5a]]
    %s115 = sld [smem:[#allocation2 + $0x5b]]
    %s116 = sld [smem:[#allocation2 + $0x5c]]
    %s117 = sld [smem:[#allocation2 + $0x5d]]
    %s118 = sld [smem:[#allocation2 + $0x5e]]
    %s119 = sld [smem:[#allocation2 + $0x5f]]
    %s120 = sld [smem:[#allocation2 + $0x60]]
    %s121 = sld [smem:[#allocation2 + $0x61]]
    %s122 = sld [smem:[#allocation2 + $0x62]]
    %s123 = sld [smem:[#allocation2 + $0x63]]
    %s124 = sld [smem:[#allocation2 + $0x64]]
    %s125 = sld [smem:[#allocation2 + $0x65]]
    %s126 = sld [smem:[#allocation2 + $0x66]]
    %s127 = sld [smem:[#allocation2 + $0x67]]
    %s128 = sld [smem:[#allocation2 + $0x68]]
    %s129 = sld [smem:[#allocation2 + $0x69]]
    %s130 = sld [smem:[#allocation2 + $0x6a]]
    %s131 = sld [smem:[#allocation2 + $0x6b]]
    %s132 = sld [smem:[#allocation2 + $0x6c]]
    %s133 = sld [smem:[#allocation2 + $0x6d]]
    %s134 = sld [smem:[#allocation2 + $0x6e]]
    %s135 = sld [smem:[#allocation2 + $0x6f]]
    %s136 = sld [smem:[#allocation2 + $0x70]]
    %s137 = sld [smem:[#allocation2 + $0x71]]
    %s138 = sld [smem:[#allocation2 + $0x72]]
    %s139 = sld [smem:[#allocation2 + $0x73]]
    %s140 = sld [smem:[#allocation2 + $0x74]]
    %s141 = sld [smem:[#allocation2 + $0x75]]
    %s142 = sld [smem:[#allocation2 + $0x76]]
    %s143 = sld [smem:[#allocation2 + $0x77]]
    %s144 = sld [smem:[#allocation2 + $0x78]]
    %s145 = sld [smem:[#allocation2 + $0x79]]
    %s146 = sld [smem:[#allocation2 + $0x7a]]
    %s147 = sld [smem:[#allocation2 + $0x7b]]
    %s148 = sld [smem:[#allocation2 + $0x7c]]
    %s149 = sld [smem:[#allocation2 + $0x7d]]
    %s150 = sld [smem:[#allocation2 + $0x7e]]
    %v151 = vld [vmem:[%s1] sm:$0xff]
    %v152 = vld [vmem:[%s1 + $0x8] sm:$0xff]
    %v153 = vstv %s24
    %v154 = vmul.f32 %v151, %v153
    %v155 = vmul.f32 %v152, %v153
    %v156 = vstv %s36
    %v157 = vmul.f32 %v151, %v156
    %v158 = vmul.f32 %v152, %v156
    %v159 = vstv %s48
    %v160 = vmul.f32 %v151, %v159
    %v161 = vmul.f32 %v152, %v159
    %v162 = vstv %s60
    %v163 = vmul.f32 %v151, %v162
    %v164 = vmul.f32 %v152, %v162
    %v165 = vstv %s72
    %v166 = vmul.f32 %v151, %v165
    %v167 = vmul.f32 %v152, %v165
    %v168 = vstv %s84
    %v169 = vmul.f32 %v151, %v168
    %v170 = vmul.f32 %v152, %v168
    %s171 = sadd.s32 0, 16
    %s172 = scalar_lea.vmem %s1, %s171
    %v173 = vld [vmem:[%s172] sm:$0xff]
    %v174 = vld [vmem:[%s172 + $0x8] sm:$0xff]
    %v175 = vstv %s25
    %v176 = vmul.f32 %v173, %v175
    %v177 = vmul.f32 %v174, %v175
    %v178 = vadd.f32 %v154, %v176
    %v179 = vadd.f32 %v155, %v177
    %v180 = vstv %s37
    %v181 = vmul.f32 %v173, %v180
    %v182 = vmul.f32 %v174, %v180
    %v183 = vadd.f32 %v157, %v181
    %v184 = vadd.f32 %v158, %v182
    %v185 = vstv %s49
    %v186 = vmul.f32 %v173, %v185
    %v187 = vmul.f32 %v174, %v185
    %v188 = vadd.f32 %v160, %v186
    %v189 = vadd.f32 %v161, %v187
    %v190 = vstv %s61
    %v191 = vmul.f32 %v173, %v190
    %v192 = vmul.f32 %v174, %v190
    %v193 = vadd.f32 %v163, %v191
    %v194 = vadd.f32 %v164, %v192
    %v195 = vstv %s73
    %v196 = vmul.f32 %v173, %v195
    %v197 = vmul.f32 %v174, %v195
    %v198 = vadd.f32 %v166, %v196
    %v199 = vadd.f32 %v167, %v197
    %v200 = vstv %s85
    %v201 = vmul.f32 %v173, %v200
    %v202 = vmul.f32 %v174, %v200
    %v203 = vadd.f32 %v169, %v201
    %v204 = vadd.f32 %v170, %v202
    %s205 = sadd.s32 0, 32
    %s206 = scalar_lea.vmem %s1, %s205
    %v207 = vld [vmem:[%s206] sm:$0xff]
    %v208 = vld [vmem:[%s206 + $0x8] sm:$0xff]
    %v209 = vstv %s26
    %v210 = vmul.f32 %v207, %v209
    %v211 = vmul.f32 %v208, %v209
    %v212 = vadd.f32 %v178, %v210
    %v213 = vadd.f32 %v179, %v211
    %v214 = vstv %s38
    %v215 = vmul.f32 %v207, %v214
    %v216 = vmul.f32 %v208, %v214
    %v217 = vadd.f32 %v183, %v215
    %v218 = vadd.f32 %v184, %v216
    %v219 = vstv %s50
    %v220 = vmul.f32 %v207, %v219
    %v221 = vmul.f32 %v208, %v219
    %v222 = vadd.f32 %v188, %v220
    %v223 = vadd.f32 %v189, %v221
    %v224 = vstv %s62
    %v225 = vmul.f32 %v207, %v224
    %v226 = vmul.f32 %v208, %v224
    %v227 = vadd.f32 %v193, %v225
    %v228 = vadd.f32 %v194, %v226
    %v229 = vstv %s74
    %v230 = vmul.f32 %v207, %v229
    %v231 = vmul.f32 %v208, %v229
    %v232 = vadd.f32 %v198, %v230
    %v233 = vadd.f32 %v199, %v231
    %v234 = vstv %s86
    %v235 = vmul.f32 %v207, %v234
    %v236 = vmul.f32 %v208, %v234
    %v237 = vadd.f32 %v203, %v235
    %v238 = vadd.f32 %v204, %v236
    %s239 = sadd.s32 0, 48
    %s240 = scalar_lea.vmem %s1, %s239
    %v241 = vld [vmem:[%s240] sm:$0xff]
    %v242 = vld [vmem:[%s240 + $0x8] sm:$0xff]
    %v243 = vstv %s27
    %v244 = vmul.f32 %v241, %v243
    %v245 = vmul.f32 %v242, %v243
    %v246 = vadd.f32 %v212, %v244
    %v247 = vadd.f32 %v213, %v245
    %v248 = vstv %s39
    %v249 = vmul.f32 %v241, %v248
    %v250 = vmul.f32 %v242, %v248
    %v251 = vadd.f32 %v217, %v249
    %v252 = vadd.f32 %v218, %v250
    %v253 = vstv %s51
    %v254 = vmul.f32 %v241, %v253
    %v255 = vmul.f32 %v242, %v253
    %v256 = vadd.f32 %v222, %v254
    %v257 = vadd.f32 %v223, %v255
    %v258 = vstv %s63
    %v259 = vmul.f32 %v241, %v258
    %v260 = vmul.f32 %v242, %v258
    %v261 = vadd.f32 %v227, %v259
    %v262 = vadd.f32 %v228, %v260
    %v263 = vstv %s75
    %v264 = vmul.f32 %v241, %v263
    %v265 = vmul.f32 %v242, %v263
    %v266 = vadd.f32 %v232, %v264
    %v267 = vadd.f32 %v233, %v265
    %v268 = vstv %s87
    %v269 = vmul.f32 %v241, %v268
    %v270 = vmul.f32 %v242, %v268
    %v271 = vadd.f32 %v237, %v269
    %v272 = vadd.f32 %v238, %v270
    %s273 = sadd.s32 0, 64
    %s274 = scalar_lea.vmem %s1, %s273
    %v275 = vld [vmem:[%s274] sm:$0xff]
    %v276 = vld [vmem:[%s274 + $0x8] sm:$0xff]
    %v277 = vstv %s28
    %v278 = vmul.f32 %v275, %v277
    %v279 = vmul.f32 %v276, %v277
    %v280 = vadd.f32 %v246, %v278
    %v281 = vadd.f32 %v247, %v279
    %v282 = vstv %s40
    %v283 = vmul.f32 %v275, %v282
    %v284 = vmul.f32 %v276, %v282
    %v285 = vadd.f32 %v251, %v283
    %v286 = vadd.f32 %v252, %v284
    %v287 = vstv %s52
    %v288 = vmul.f32 %v275, %v287
    %v289 = vmul.f32 %v276, %v287
    %v290 = vadd.f32 %v256, %v288
    %v291 = vadd.f32 %v257, %v289
    %v292 = vstv %s64
    %v293 = vmul.f32 %v275, %v292
    %v294 = vmul.f32 %v276, %v292
    %v295 = vadd.f32 %v261, %v293
    %v296 = vadd.f32 %v262, %v294
    %v297 = vstv %s76
    %v298 = vmul.f32 %v275, %v297
    %v299 = vmul.f32 %v276, %v297
    %v300 = vadd.f32 %v266, %v298
    %v301 = vadd.f32 %v267, %v299
    %v302 = vstv %s88
    %v303 = vmul.f32 %v275, %v302
    %v304 = vmul.f32 %v276, %v302
    %v305 = vadd.f32 %v271, %v303
    %v306 = vadd.f32 %v272, %v304
    %s307 = sadd.s32 0, 80
    %s308 = scalar_lea.vmem %s1, %s307
    %v309 = vld [vmem:[%s308] sm:$0xff]
    %v310 = vld [vmem:[%s308 + $0x8] sm:$0xff]
    %v311 = vstv %s29
    %v312 = vmul.f32 %v309, %v311
    %v313 = vmul.f32 %v310, %v311
    %v314 = vadd.f32 %v280, %v312
    %v315 = vadd.f32 %v281, %v313
    %v316 = vstv %s41
    %v317 = vmul.f32 %v309, %v316
    %v318 = vmul.f32 %v310, %v316
    %v319 = vadd.f32 %v285, %v317
    %v320 = vadd.f32 %v286, %v318
    %v321 = vstv %s53
    %v322 = vmul.f32 %v309, %v321
    %v323 = vmul.f32 %v310, %v321
    %v324 = vadd.f32 %v290, %v322
    %v325 = vadd.f32 %v291, %v323
    %v326 = vstv %s65
    %v327 = vmul.f32 %v309, %v326
    %v328 = vmul.f32 %v310, %v326
    %v329 = vadd.f32 %v295, %v327
    %v330 = vadd.f32 %v296, %v328
    %v331 = vstv %s77
    %v332 = vmul.f32 %v309, %v331
    %v333 = vmul.f32 %v310, %v331
    %v334 = vadd.f32 %v300, %v332
    %v335 = vadd.f32 %v301, %v333
    %v336 = vstv %s89
    %v337 = vmul.f32 %v309, %v336
    %v338 = vmul.f32 %v310, %v336
    %v339 = vadd.f32 %v305, %v337
    %v340 = vadd.f32 %v306, %v338
    %s341 = sadd.s32 0, 96
    %s342 = scalar_lea.vmem %s1, %s341
    %v343 = vld [vmem:[%s342] sm:$0xff]
    %v344 = vld [vmem:[%s342 + $0x8] sm:$0xff]
    %v345 = vstv %s30
    %v346 = vmul.f32 %v343, %v345
    %v347 = vmul.f32 %v344, %v345
    %v348 = vadd.f32 %v314, %v346
    %v349 = vadd.f32 %v315, %v347
    %v350 = vstv %s42
    %v351 = vmul.f32 %v343, %v350
    %v352 = vmul.f32 %v344, %v350
    %v353 = vadd.f32 %v319, %v351
    %v354 = vadd.f32 %v320, %v352
    %v355 = vstv %s54
    %v356 = vmul.f32 %v343, %v355
    %v357 = vmul.f32 %v344, %v355
    %v358 = vadd.f32 %v324, %v356
    %v359 = vadd.f32 %v325, %v357
    %v360 = vstv %s66
    %v361 = vmul.f32 %v343, %v360
    %v362 = vmul.f32 %v344, %v360
    %v363 = vadd.f32 %v329, %v361
    %v364 = vadd.f32 %v330, %v362
    %v365 = vstv %s78
    %v366 = vmul.f32 %v343, %v365
    %v367 = vmul.f32 %v344, %v365
    %v368 = vadd.f32 %v334, %v366
    %v369 = vadd.f32 %v335, %v367
    %v370 = vstv %s90
    %v371 = vmul.f32 %v343, %v370
    %v372 = vmul.f32 %v344, %v370
    %v373 = vadd.f32 %v339, %v371
    %v374 = vadd.f32 %v340, %v372
    %s375 = sadd.s32 0, 112
    %s376 = scalar_lea.vmem %s1, %s375
    %v377 = vld [vmem:[%s376] sm:$0xff]
    %v378 = vld [vmem:[%s376 + $0x8] sm:$0xff]
    %v379 = vstv %s31
    %v380 = vmul.f32 %v377, %v379
    %v381 = vmul.f32 %v378, %v379
    %v382 = vadd.f32 %v348, %v380
    %v383 = vadd.f32 %v349, %v381
    %v384 = vstv %s43
    %v385 = vmul.f32 %v377, %v384
    %v386 = vmul.f32 %v378, %v384
    %v387 = vadd.f32 %v353, %v385
    %v388 = vadd.f32 %v354, %v386
    %v389 = vstv %s55
    %v390 = vmul.f32 %v377, %v389
    %v391 = vmul.f32 %v378, %v389
    %v392 = vadd.f32 %v358, %v390
    %v393 = vadd.f32 %v359, %v391
    %v394 = vstv %s67
    %v395 = vmul.f32 %v377, %v394
    %v396 = vmul.f32 %v378, %v394
    %v397 = vadd.f32 %v363, %v395
    %v398 = vadd.f32 %v364, %v396
    %v399 = vstv %s79
    %v400 = vmul.f32 %v377, %v399
    %v401 = vmul.f32 %v378, %v399
    %v402 = vadd.f32 %v368, %v400
    %v403 = vadd.f32 %v369, %v401
    %v404 = vstv %s91
    %v405 = vmul.f32 %v377, %v404
    %v406 = vmul.f32 %v378, %v404
    %v407 = vadd.f32 %v373, %v405
    %v408 = vadd.f32 %v374, %v406
    %s409 = sadd.s32 0, 128
    %s410 = scalar_lea.vmem %s1, %s409
    %v411 = vld [vmem:[%s410] sm:$0xff]
    %v412 = vld [vmem:[%s410 + $0x8] sm:$0xff]
    %v413 = vstv %s32
    %v414 = vmul.f32 %v411, %v413
    %v415 = vmul.f32 %v412, %v413
    %v416 = vadd.f32 %v382, %v414
    %v417 = vadd.f32 %v383, %v415
    %v418 = vstv %s44
    %v419 = vmul.f32 %v411, %v418
    %v420 = vmul.f32 %v412, %v418
    %v421 = vadd.f32 %v387, %v419
    %v422 = vadd.f32 %v388, %v420
    %v423 = vstv %s56
    %v424 = vmul.f32 %v411, %v423
    %v425 = vmul.f32 %v412, %v423
    %v426 = vadd.f32 %v392, %v424
    %v427 = vadd.f32 %v393, %v425
    %v428 = vstv %s68
    %v429 = vmul.f32 %v411, %v428
    %v430 = vmul.f32 %v412, %v428
    %v431 = vadd.f32 %v397, %v429
    %v432 = vadd.f32 %v398, %v430
    %v433 = vstv %s80
    %v434 = vmul.f32 %v411, %v433
    %v435 = vmul.f32 %v412, %v433
    %v436 = vadd.f32 %v402, %v434
    %v437 = vadd.f32 %v403, %v435
    %v438 = vstv %s92
    %v439 = vmul.f32 %v411, %v438
    %v440 = vmul.f32 %v412, %v438
    %v441 = vadd.f32 %v407, %v439
    %v442 = vadd.f32 %v408, %v440
    %s443 = sadd.s32 0, 144
    %s444 = scalar_lea.vmem %s1, %s443
    %v445 = vld [vmem:[%s444] sm:$0xff]
    %v446 = vld [vmem:[%s444 + $0x8] sm:$0xff]
    %v447 = vstv %s33
    %v448 = vmul.f32 %v445, %v447
    %v449 = vmul.f32 %v446, %v447
    %v450 = vadd.f32 %v416, %v448
    %v451 = vadd.f32 %v417, %v449
    %v452 = vstv %s45
    %v453 = vmul.f32 %v445, %v452
    %v454 = vmul.f32 %v446, %v452
    %v455 = vadd.f32 %v421, %v453
    %v456 = vadd.f32 %v422, %v454
    %v457 = vstv %s57
    %v458 = vmul.f32 %v445, %v457
    %v459 = vmul.f32 %v446, %v457
    %v460 = vadd.f32 %v426, %v458
    %v461 = vadd.f32 %v427, %v459
    %v462 = vstv %s69
    %v463 = vmul.f32 %v445, %v462
    %v464 = vmul.f32 %v446, %v462
    %v465 = vadd.f32 %v431, %v463
    %v466 = vadd.f32 %v432, %v464
    %v467 = vstv %s81
    %v468 = vmul.f32 %v445, %v467
    %v469 = vmul.f32 %v446, %v467
    %v470 = vadd.f32 %v436, %v468
    %v471 = vadd.f32 %v437, %v469
    %v472 = vstv %s93
    %v473 = vmul.f32 %v445, %v472
    %v474 = vmul.f32 %v446, %v472
    %v475 = vadd.f32 %v441, %v473
    %v476 = vadd.f32 %v442, %v474
    %s477 = sadd.s32 0, 160
    %s478 = scalar_lea.vmem %s1, %s477
    %v479 = vld [vmem:[%s478] sm:$0xff]
    %v480 = vld [vmem:[%s478 + $0x8] sm:$0xff]
    %v481 = vstv %s34
    %v482 = vmul.f32 %v479, %v481
    %v483 = vmul.f32 %v480, %v481
    %v484 = vadd.f32 %v450, %v482
    %v485 = vadd.f32 %v451, %v483
    %v486 = vstv %s46
    %v487 = vmul.f32 %v479, %v486
    %v488 = vmul.f32 %v480, %v486
    %v489 = vadd.f32 %v455, %v487
    %v490 = vadd.f32 %v456, %v488
    %v491 = vstv %s58
    %v492 = vmul.f32 %v479, %v491
    %v493 = vmul.f32 %v480, %v491
    %v494 = vadd.f32 %v460, %v492
    %v495 = vadd.f32 %v461, %v493
    %v496 = vstv %s70
    %v497 = vmul.f32 %v479, %v496
    %v498 = vmul.f32 %v480, %v496
    %v499 = vadd.f32 %v465, %v497
    %v500 = vadd.f32 %v466, %v498
    %v501 = vstv %s82
    %v502 = vmul.f32 %v479, %v501
    %v503 = vmul.f32 %v480, %v501
    %v504 = vadd.f32 %v470, %v502
    %v505 = vadd.f32 %v471, %v503
    %v506 = vstv %s94
    %v507 = vmul.f32 %v479, %v506
    %v508 = vmul.f32 %v480, %v506
    %v509 = vadd.f32 %v475, %v507
    %v510 = vadd.f32 %v476, %v508
    %s511 = sadd.s32 0, 176
    %s512 = scalar_lea.vmem %s1, %s511
    %v513 = vld [vmem:[%s512] sm:$0xff]
    %v514 = vld [vmem:[%s512 + $0x8] sm:$0xff]
    %v515 = vstv %s35
    %v516 = vmul.f32 %v513, %v515
    %v517 = vmul.f32 %v514, %v515
    %v518 = vadd.f32 %v484, %v516
    %v519 = vadd.f32 %v485, %v517
    %v520 = vstv %s47
    %v521 = vmul.f32 %v513, %v520
    %v522 = vmul.f32 %v514, %v520
    %v523 = vadd.f32 %v489, %v521
    %v524 = vadd.f32 %v490, %v522
    %v525 = vstv %s59
    %v526 = vmul.f32 %v513, %v525
    %v527 = vmul.f32 %v514, %v525
    %v528 = vadd.f32 %v494, %v526
    %v529 = vadd.f32 %v495, %v527
    %v530 = vstv %s71
    %v531 = vmul.f32 %v513, %v530
    %v532 = vmul.f32 %v514, %v530
    %v533 = vadd.f32 %v499, %v531
    %v534 = vadd.f32 %v500, %v532
    %v535 = vstv %s83
    %v536 = vmul.f32 %v513, %v535
    %v537 = vmul.f32 %v514, %v535
    %v538 = vadd.f32 %v504, %v536
    %v539 = vadd.f32 %v505, %v537
    %v540 = vstv %s95
    %v541 = vmul.f32 %v513, %v540
    %v542 = vmul.f32 %v514, %v540
    %v543 = vadd.f32 %v509, %v541
    %v544 = vadd.f32 %v510, %v542
    %v545 = vstv %s96
    %v546 = vadd.f32 %v518, %v545
    %v547 = vadd.f32 %v519, %v545
    %v548 = vmax.f32 %v546, 0.0
    %v549 = vmax.f32 %v547, 0.0
    %v550 = vstv %s97
    %v551 = vadd.f32 %v523, %v550
    %v552 = vadd.f32 %v524, %v550
    %v553 = vmax.f32 %v551, 0.0
    %v554 = vmax.f32 %v552, 0.0
    %v555 = vstv %s98
    %v556 = vadd.f32 %v528, %v555
    %v557 = vadd.f32 %v529, %v555
    %v558 = vmax.f32 %v556, 0.0
    %v559 = vmax.f32 %v557, 0.0
    %v560 = vstv %s99
    %v561 = vadd.f32 %v533, %v560
    %v562 = vadd.f32 %v534, %v560
    %v563 = vmax.f32 %v561, 0.0
    %v564 = vmax.f32 %v562, 0.0
    %v565 = vstv %s100
    %v566 = vadd.f32 %v538, %v565
    %v567 = vadd.f32 %v539, %v565
    %v568 = vmax.f32 %v566, 0.0
    %v569 = vmax.f32 %v567, 0.0
    %v570 = vstv %s101
    %v571 = vadd.f32 %v543, %v570
    %v572 = vadd.f32 %v544, %v570
    %v573 = vmax.f32 %v571, 0.0
    %v574 = vmax.f32 %v572, 0.0
    %v575 = vstv %s102
    %v576 = vmul.f32 %v548, %v575
    %v577 = vmul.f32 %v549, %v575
    %v578 = vstv %s108
    %v579 = vmul.f32 %v548, %v578
    %v580 = vmul.f32 %v549, %v578
    %v581 = vstv %s114
    %v582 = vmul.f32 %v548, %v581
    %v583 = vmul.f32 %v549, %v581
    %v584 = vstv %s120
    %v585 = vmul.f32 %v548, %v584
    %v586 = vmul.f32 %v549, %v584
    %v587 = vstv %s126
    %v588 = vmul.f32 %v548, %v587
    %v589 = vmul.f32 %v549, %v587
    %v590 = vstv %s132
    %v591 = vmul.f32 %v548, %v590
    %v592 = vmul.f32 %v549, %v590
    %v593 = vstv %s103
    %v594 = vmul.f32 %v553, %v593
    %v595 = vmul.f32 %v554, %v593
    %v596 = vadd.f32 %v576, %v594
    %v597 = vadd.f32 %v577, %v595
    %v598 = vstv %s109
    %v599 = vmul.f32 %v553, %v598
    %v600 = vmul.f32 %v554, %v598
    %v601 = vadd.f32 %v579, %v599
    %v602 = vadd.f32 %v580, %v600
    %v603 = vstv %s115
    %v604 = vmul.f32 %v553, %v603
    %v605 = vmul.f32 %v554, %v603
    %v606 = vadd.f32 %v582, %v604
    %v607 = vadd.f32 %v583, %v605
    %v608 = vstv %s121
    %v609 = vmul.f32 %v553, %v608
    %v610 = vmul.f32 %v554, %v608
    %v611 = vadd.f32 %v585, %v609
    %v612 = vadd.f32 %v586, %v610
    %v613 = vstv %s127
    %v614 = vmul.f32 %v553, %v613
    %v615 = vmul.f32 %v554, %v613
    %v616 = vadd.f32 %v588, %v614
    %v617 = vadd.f32 %v589, %v615
    %v618 = vstv %s133
    %v619 = vmul.f32 %v553, %v618
    %v620 = vmul.f32 %v554, %v618
    %v621 = vadd.f32 %v591, %v619
    %v622 = vadd.f32 %v592, %v620
    %v623 = vstv %s104
    %v624 = vmul.f32 %v558, %v623
    %v625 = vmul.f32 %v559, %v623
    %v626 = vadd.f32 %v596, %v624
    %v627 = vadd.f32 %v597, %v625
    %v628 = vstv %s110
    %v629 = vmul.f32 %v558, %v628
    %v630 = vmul.f32 %v559, %v628
    %v631 = vadd.f32 %v601, %v629
    %v632 = vadd.f32 %v602, %v630
    %v633 = vstv %s116
    %v634 = vmul.f32 %v558, %v633
    %v635 = vmul.f32 %v559, %v633
    %v636 = vadd.f32 %v606, %v634
    %v637 = vadd.f32 %v607, %v635
    %v638 = vstv %s122
    %v639 = vmul.f32 %v558, %v638
    %v640 = vmul.f32 %v559, %v638
    %v641 = vadd.f32 %v611, %v639
    %v642 = vadd.f32 %v612, %v640
    %v643 = vstv %s128
    %v644 = vmul.f32 %v558, %v643
    %v645 = vmul.f32 %v559, %v643
    %v646 = vadd.f32 %v616, %v644
    %v647 = vadd.f32 %v617, %v645
    %v648 = vstv %s134
    %v649 = vmul.f32 %v558, %v648
    %v650 = vmul.f32 %v559, %v648
    %v651 = vadd.f32 %v621, %v649
    %v652 = vadd.f32 %v622, %v650
    %v653 = vstv %s105
    %v654 = vmul.f32 %v563, %v653
    %v655 = vmul.f32 %v564, %v653
    %v656 = vadd.f32 %v626, %v654
    %v657 = vadd.f32 %v627, %v655
    %v658 = vstv %s111
    %v659 = vmul.f32 %v563, %v658
    %v660 = vmul.f32 %v564, %v658
    %v661 = vadd.f32 %v631, %v659
    %v662 = vadd.f32 %v632, %v660
    %v663 = vstv %s117
    %v664 = vmul.f32 %v563, %v663
    %v665 = vmul.f32 %v564, %v663
    %v666 = vadd.f32 %v636, %v664
    %v667 = vadd.f32 %v637, %v665
    %v668 = vstv %s123
    %v669 = vmul.f32 %v563, %v668
    %v670 = vmul.f32 %v564, %v668
    %v671 = vadd.f32 %v641, %v669
    %v672 = vadd.f32 %v642, %v670
    %v673 = vstv %s129
    %v674 = vmul.f32 %v563, %v673
    %v675 = vmul.f32 %v564, %v673
    %v676 = vadd.f32 %v646, %v674
    %v677 = vadd.f32 %v647, %v675
    %v678 = vstv %s135
    %v679 = vmul.f32 %v563, %v678
    %v680 = vmul.f32 %v564, %v678
    %v681 = vadd.f32 %v651, %v679
    %v682 = vadd.f32 %v652, %v680
    %v683 = vstv %s106
    %v684 = vmul.f32 %v568, %v683
    %v685 = vmul.f32 %v569, %v683
    %v686 = vadd.f32 %v656, %v684
    %v687 = vadd.f32 %v657, %v685
    %v688 = vstv %s112
    %v689 = vmul.f32 %v568, %v688
    %v690 = vmul.f32 %v569, %v688
    %v691 = vadd.f32 %v661, %v689
    %v692 = vadd.f32 %v662, %v690
    %v693 = vstv %s118
    %v694 = vmul.f32 %v568, %v693
    %v695 = vmul.f32 %v569, %v693
    %v696 = vadd.f32 %v666, %v694
    %v697 = vadd.f32 %v667, %v695
    %v698 = vstv %s124
    %v699 = vmul.f32 %v568, %v698
    %v700 = vmul.f32 %v569, %v698
    %v701 = vadd.f32 %v671, %v699
    %v702 = vadd.f32 %v672, %v700
    %v703 = vstv %s130
    %v704 = vmul.f32 %v568, %v703
    %v705 = vmul.f32 %v569, %v703
    %v706 = vadd.f32 %v676, %v704
    %v707 = vadd.f32 %v677, %v705
    %v708 = vstv %s136
    %v709 = vmul.f32 %v568, %v708
    %v710 = vmul.f32 %v569, %v708
    %v711 = vadd.f32 %v681, %v709
    %v712 = vadd.f32 %v682, %v710
    %v713 = vstv %s107
    %v714 = vmul.f32 %v573, %v713
    %v715 = vmul.f32 %v574, %v713
    %v716 = vadd.f32 %v686, %v714
    %v717 = vadd.f32 %v687, %v715
    %v718 = vstv %s113
    %v719 = vmul.f32 %v573, %v718
    %v720 = vmul.f32 %v574, %v718
    %v721 = vadd.f32 %v691, %v719
    %v722 = vadd.f32 %v692, %v720
    %v723 = vstv %s119
    %v724 = vmul.f32 %v573, %v723
    %v725 = vmul.f32 %v574, %v723
    %v726 = vadd.f32 %v696, %v724
    %v727 = vadd.f32 %v697, %v725
    %v728 = vstv %s125
    %v729 = vmul.f32 %v573, %v728
    %v730 = vmul.f32 %v574, %v728
    %v731 = vadd.f32 %v701, %v729
    %v732 = vadd.f32 %v702, %v730
    %v733 = vstv %s131
    %v734 = vmul.f32 %v573, %v733
    %v735 = vmul.f32 %v574, %v733
    %v736 = vadd.f32 %v706, %v734
    %v737 = vadd.f32 %v707, %v735
    %v738 = vstv %s137
    %v739 = vmul.f32 %v573, %v738
    %v740 = vmul.f32 %v574, %v738
    %v741 = vadd.f32 %v711, %v739
    %v742 = vadd.f32 %v712, %v740
    %v743 = vstv %s138
    %v744 = vadd.f32 %v716, %v743
    %v745 = vadd.f32 %v717, %v743
    %v746 = vmax.f32 %v744, 0.0
    %v747 = vmax.f32 %v745, 0.0
    %v748 = vstv %s139
    %v749 = vadd.f32 %v721, %v748
    %v750 = vadd.f32 %v722, %v748
    %v751 = vmax.f32 %v749, 0.0
    %v752 = vmax.f32 %v750, 0.0
    %v753 = vstv %s140
    %v754 = vadd.f32 %v726, %v753
    %v755 = vadd.f32 %v727, %v753
    %v756 = vmax.f32 %v754, 0.0
    %v757 = vmax.f32 %v755, 0.0
    %v758 = vstv %s141
    %v759 = vadd.f32 %v731, %v758
    %v760 = vadd.f32 %v732, %v758
    %v761 = vmax.f32 %v759, 0.0
    %v762 = vmax.f32 %v760, 0.0
    %v763 = vstv %s142
    %v764 = vadd.f32 %v736, %v763
    %v765 = vadd.f32 %v737, %v763
    %v766 = vmax.f32 %v764, 0.0
    %v767 = vmax.f32 %v765, 0.0
    %v768 = vstv %s143
    %v769 = vadd.f32 %v741, %v768
    %v770 = vadd.f32 %v742, %v768
    %v771 = vmax.f32 %v769, 0.0
    %v772 = vmax.f32 %v770, 0.0
    %v773 = vstv %s144
    %v774 = vmul.f32 %v746, %v773
    %v775 = vmul.f32 %v747, %v773
    %v776 = vstv %s145
    %v777 = vmul.f32 %v751, %v776
    %v778 = vmul.f32 %v752, %v776
    %v779 = vadd.f32 %v774, %v777
    %v780 = vadd.f32 %v775, %v778
    %v781 = vstv %s146
    %v782 = vmul.f32 %v756, %v781
    %v783 = vmul.f32 %v757, %v781
    %v784 = vadd.f32 %v779, %v782
    %v785 = vadd.f32 %v780, %v783
    %v786 = vstv %s147
    %v787 = vmul.f32 %v761, %v786
    %v788 = vmul.f32 %v762, %v786
    %v789 = vadd.f32 %v784, %v787
    %v790 = vadd.f32 %v785, %v788
    %v791 = vstv %s148
    %v792 = vmul.f32 %v766, %v791
    %v793 = vmul.f32 %v767, %v791
    %v794 = vadd.f32 %v789, %v792
    %v795 = vadd.f32 %v790, %v793
    %v796 = vstv %s149
    %v797 = vmul.f32 %v771, %v796
    %v798 = vmul.f32 %v772, %v796
    %v799 = vadd.f32 %v794, %v797
    %v800 = vadd.f32 %v795, %v798
    %v801 = vstv %s150
    %v802 = vadd.f32 %v799, %v801
    %v803 = vadd.f32 %v800, %v801
    %v804 = vmul.f32 %v802, 0.5
    %v805 = vmul.f32 %v803, 0.5
    %v806 = vtanh.pop %v804
    %v807 = vtanh.pop %v805
    %v808 = vmul.f32 %v806, 0.5
    %v809 = vmul.f32 %v807, 0.5
    %v810 = vadd.f32 %v808, 0.5
    %v811 = vadd.f32 %v809, 0.5
    %812 = vst [vmem:[%s2] sm:$0xff] %v810
    %813 = vst [vmem:[%s2 + $0x8] sm:$0xff] %v811
    // Predicated region
    $region14: #{_ann_forward_jit.1} parent=1 // pred_check
      _
    $region15: #{_ann_forward_jit.1} parent=1 // pred_check_branch
      %815 = sbr.rel (0) target = $region17
    $region16: #{_ann_forward_jit.1} parent=1 // pred_region
      _
    $region17: #{_ann_forward_jit.1} parent=1 // pred_fallthru
      _
    // Predicated region
    $region18: #{_ann_forward_jit.1} parent=1 // pred_check
      _
    $region19: #{_ann_forward_jit.1} parent=1 // pred_check_branch
      %817 = sbr.rel (0) target = $region21
    $region20: #{_ann_forward_jit.1} parent=1 // pred_region
      _
    $region21: #{_ann_forward_jit.1} parent=1 // pred_fallthru
      _
    %818 = vsyncpa [#allocation3], 1

</llo_original>
